<compile_context>
chip_gen: v5e
topology: v5e:2x2
jax: 0.10.0
libtpu: 0.0.40
codegen_flags: <defaults>
</compile_context>

<pallas_src>
import math

import jax
import jax.numpy as jnp
from jax.experimental import pallas as pl
from jax.experimental.pallas import tpu as pltpu

# ----- small synthetic OpenCLIP text-tower config (stand-in for ViT-H-14) -----
VOCAB = 128
D_MODEL = 32
N_HEADS = 4
D_HEAD = D_MODEL // N_HEADS
D_FF = 4 * D_MODEL
N_LAYERS = 2
MAX_LEN = 8            # stand-in for context_length=77 (keep a multiple of 8)
LN_EPS = 1e-5
NEG_INF = -1e9         # finite stand-in for the -inf entries of model.attn_mask


def _layernorm(x, gamma, beta):
    # standard LayerNorm (f32): mean subtraction, rsqrt(var), scale + bias
    mu = jnp.mean(x, axis=-1, keepdims=True)
    xc = x - mu
    var = jnp.mean(xc * xc, axis=-1, keepdims=True)
    return xc * jax.lax.rsqrt(var + LN_EPS) * gamma + beta


def _clip_text_kernel(
    x_ref, pos_ref, lnf_ref,
    wqkv_ref, bqkv_ref, wo_ref, vecd_ref,
    wfc_ref, bfc_ref, wpr_ref,
    out_ref,
    x_scr,
):
    l = pl.program_id(1)
    bt, S, D = x_scr.shape                  # batch tile, seq, model dim
    H = wo_ref.shape[0]
    Dh = wo_ref.shape[1]

    # first layer step of this batch tile: token emb + learned positional emb
    @pl.when(l == 0)
    def _():
        x_scr[...] = x_ref[...] + pos_ref[...]

    x = x_scr[...]                          # (bt, S, D) f32 residual stream

    # packed per-layer vectors: [ln1_g, ln1_b, ln2_g, ln2_b, b_out, b_proj]
    vec = vecd_ref[...]                     # (6, D) f32
    ln1_g, ln1_b = vec[0:1], vec[1:2]
    ln2_g, ln2_b = vec[2:3], vec[3:4]
    b_out, b_proj = vec[4:5], vec[5:6]

    # ---- self-attention sub-block: x + out_proj(MHA(LN1(x), causal)) ----
    h1 = _layernorm(x, ln1_g, ln1_b).astype(jnp.bfloat16)      # (bt, S, D)

    w_all = wqkv_ref[...]                   # (3H, D, Dh) bf16, head-major
    b_all = bqkv_ref[...]                   # (3H, 1, Dh) f32, head-major
    wq, wk, wv = w_all[0:H], w_all[H:2 * H], w_all[2 * H:3 * H]
    bq, bk, bv = b_all[0:H], b_all[H:2 * H], b_all[2 * H:3 * H]
    wo = wo_ref[...]                        # (H, Dh, D) bf16

    # causal mask built in-kernel -- no (S, S) HBM input / VMEM resident buffer
    rows = jax.lax.broadcasted_iota(jnp.int32, (S, S), 0)
    cols = jax.lax.broadcasted_iota(jnp.int32, (S, S), 1)
    causal = jnp.where(cols > rows, NEG_INF, 0.0).astype(jnp.float32)

    scale = 1.0 / math.sqrt(Dh)

    # Small static batch-tile loop (leading-dim indexing only, no lane slicing);
    # heads are batched inside each iteration so the MXU sees batched dots.
    for b in range(bt):
        hb = jnp.broadcast_to(h1[b][None], (H, S, D))          # (H, S, D) bf16
        q = jnp.einsum('hsd,hde->hse', hb, wq,
                       preferred_element_type=jnp.float32) + bq  # (H, S, Dh)
        k = jnp.einsum('hsd,hde->hse', hb, wk,
                       preferred_element_type=jnp.float32) + bk
        v = jnp.einsum('hsd,hde->hse', hb, wv,
                       preferred_element_type=jnp.float32) + bv
        s = jnp.einsum('hqe,hke->hqk', q, k,
                       preferred_element_type=jnp.float32) * scale
        s = s + causal[None]
        s = s - jnp.max(s, axis=-1, keepdims=True)
        p = jnp.exp(s)
        # TODO(synk): approx EUP reciprocal (~1e-3 rel); make exact for parity.
        p = p * pl.reciprocal(jnp.sum(p, axis=-1, keepdims=True), approx=True)
        o = jnp.einsum('hqk,hke->hqe', p, v,
                       preferred_element_type=jnp.float32)       # (H, S, Dh)
        # concat_h(o_h) @ W_out == sum_h (o_h @ W_out[rows of head h])
        ob = jnp.einsum('hse,hed->hsd', o.astype(jnp.bfloat16), wo,
                        preferred_element_type=jnp.float32)      # (H, S, D)
        x_scr[b, :, :] = x[b] + jnp.sum(ob, axis=0) + b_out      # fused residual

    x = x_scr[...]                          # (bt, S, D) after attention

    # ---- MLP sub-block: x + c_proj(GELU(c_fc(LN2(x)))) ----
    h2 = _layernorm(x, ln2_g, ln2_b).reshape(bt * S, D).astype(jnp.bfloat16)
    f = jnp.dot(h2, wfc_ref[...],
                preferred_element_type=jnp.float32) + bfc_ref[...]
    # TODO(synk): open_clip's nn.GELU is exact erf; tanh approximation used
    # here for guaranteed Mosaic lowering (~1e-3 relative difference).
    f = jax.nn.gelu(f, approximate=True)
    m = jnp.dot(f.astype(jnp.bfloat16), wpr_ref[...],
                preferred_element_type=jnp.float32)
    x = x + m.reshape(bt, S, D) + b_proj
    x_scr[...] = x

    # final LayerNorm (model.ln_final) fused into the last layer step
    @pl.when(l == pl.num_programs(1) - 1)
    def _():
        lnf = lnf_ref[...]                  # (2, D): [gamma, beta]
        out_ref[...] = _layernorm(x, lnf[0:1], lnf[1:2])


def clip_text_forward(tokens, params, layer="last", b_tile=None):
    assert layer in ("last", "penultimate")
    layer_idx = 0 if layer == "last" else 1
    n_active = N_LAYERS - layer_idx         # 'penultimate' drops the last block

    B, S = tokens.shape
    D = D_MODEL
    if b_tile is None:
        b_tile = B                          # whole batch in one tile by default
    assert B % b_tile == 0
    num_bt = B // b_tile

    # glue: vocab-embedding gather stays in the JAX wrapper.
    # TODO(synk): no clean Pallas equivalent for the vocab gather at these sizes.
    x_emb = params["token_embedding"][tokens]                 # (B, S, D) f32
    pos = params["positional_embedding"][:S]                  # (S, D) f32

    def shared(shape):
        return pl.BlockSpec(shape, lambda bt, l: (0,) * len(shape))

    def per_layer(shape):
        return pl.BlockSpec((None,) + shape,
                            lambda bt, l: (l,) + (0,) * len(shape))

    in_specs = [
        pl.BlockSpec((b_tile, S, D), lambda bt, l: (bt, 0, 0)),   # token emb
        shared((S, D)),                                           # positional emb
        shared((2, D)),                                           # ln_final g/b
        per_layer((3 * N_HEADS, D, D_HEAD)),    # W_q/k/v, head-major, bf16
        per_layer((3 * N_HEADS, 1, D_HEAD)),    # b_q/k/v, head-major, f32
        per_layer((N_HEADS, D_HEAD, D)),        # W_out, head-major, bf16
        per_layer((6, D)),                      # packed ln1/ln2 g/b + biases
        per_layer((D, D_FF)),                   # c_fc W (bf16)
        per_layer((1, D_FF)),                   # c_fc b (f32)
        per_layer((D_FF, D)),                   # c_proj W (bf16)
    ]
    out_spec = pl.BlockSpec((b_tile, S, D), lambda bt, l: (bt, 0, 0))

    stk = lambda name: params[name][:n_active]

    return pl.pallas_call(
        _clip_text_kernel,
        grid=(num_bt, n_active),
        in_specs=in_specs,
        out_specs=out_spec,
        out_shape=jax.ShapeDtypeStruct((B, S, D), jnp.float32),
        scratch_shapes=[pltpu.VMEM((b_tile, S, D), jnp.float32)],
        compiler_params=pltpu.CompilerParams(
            # batch tiles parallel (megacore), layer axis carries the residual
            dimension_semantics=("parallel", "arbitrary"),
            vmem_limit_bytes=64 * 1024 * 1024),
    )(x_emb, pos, params["ln_f"],
      stk("w_qkv"), stk("b_qkv"), stk("w_out"), stk("vec_d"),
      stk("w_fc"), stk("b_fc"), stk("w_proj"))


# ---------------- deterministic parameter init ----------------
def init_params(key):
    ks = jax.random.split(key, 6)
    D = D_MODEL

    def nrm(k, shape, s=0.02, dtype=jnp.float32):
        return (s * jax.random.normal(k, shape, jnp.float32)).astype(dtype)

    # packed per-layer vectors: [ln1_g, ln1_b, ln2_g, ln2_b, b_out, b_proj]
    vec_d = jnp.zeros((N_LAYERS, 6, D), jnp.float32)
    vec_d = vec_d.at[:, 0].set(1.0).at[:, 2].set(1.0)

    ln_f = jnp.concatenate(
        [jnp.ones((1, D), jnp.float32), jnp.zeros((1, D), jnp.float32)], axis=0)

    return {
        "token_embedding": nrm(ks[0], (VOCAB, D)),
        "positional_embedding": nrm(ks[1], (MAX_LEN, D), 0.01),
        "ln_f": ln_f,
        # stacked per-layer parameters (leading axis = layer index);
        # matmul weights stored bf16 (streamed), biases/LN params f32.
        "w_qkv": nrm(ks[2], (N_LAYERS, 3 * N_HEADS, D, D_HEAD),
                     dtype=jnp.bfloat16),
        "b_qkv": jnp.zeros((N_LAYERS, 3 * N_HEADS, 1, D_HEAD), jnp.float32),
        "w_out": nrm(ks[3], (N_LAYERS, N_HEADS, D_HEAD, D),
                     dtype=jnp.bfloat16),
        "vec_d": vec_d,
        "w_fc": nrm(ks[4], (N_LAYERS, D, D_FF), dtype=jnp.bfloat16),
        "b_fc": jnp.zeros((N_LAYERS, 1, D_FF), jnp.float32),
        "w_proj": nrm(ks[5], (N_LAYERS, D_FF, D), dtype=jnp.bfloat16),
    }


if __name__ == "__main__":
    # TODO(synk): open_clip.tokenize (raw text -> padded int token ids) has no
    # Pallas/array equivalent; the kernel consumes pre-tokenized int32 ids.
    key = jax.random.PRNGKey(0)
    pkey, tkey = jax.random.split(key)
    params = init_params(pkey)
    tokens = jax.random.randint(tkey, (2, MAX_LEN), 0, VOCAB, dtype=jnp.int32)

    z = jax.jit(clip_text_forward)(tokens, params)
    jax.block_until_ready(z)
    assert z.shape == (2, MAX_LEN, D_MODEL) and z.dtype == jnp.float32
    assert bool(jnp.all(jnp.isfinite(z)))
    print("KERNEL_OK")
</pallas_src>

<mosaic_0001>
module attributes {stable_mosaic.version = 11 : i64} {
  func.func @_clip_text_kernel(%arg0: i32, %arg1: i32, %arg2: memref<2x8x32xf32, #tpu.memory_space<vmem>>, %arg3: memref<8x32xf32, #tpu.memory_space<vmem>>, %arg4: memref<2x32xf32, #tpu.memory_space<vmem>>, %arg5: memref<1x12x32x8xbf16, #tpu.memory_space<vmem>>, %arg6: memref<1x12x1x8xf32, #tpu.memory_space<vmem>>, %arg7: memref<1x4x8x32xbf16, #tpu.memory_space<vmem>>, %arg8: memref<1x6x32xf32, #tpu.memory_space<vmem>>, %arg9: memref<1x32x128xbf16, #tpu.memory_space<vmem>>, %arg10: memref<1x1x128xf32, #tpu.memory_space<vmem>>, %arg11: memref<1x128x32xbf16, #tpu.memory_space<vmem>>, %arg12: memref<2x8x32xf32, #tpu.memory_space<vmem>>, %arg13: memref<2x8x32xf32, #tpu.memory_space<vmem>>) attributes {dimension_semantics = [#tpu.dimension_semantics<parallel>, #tpu.dimension_semantics<arbitrary>], iteration_bounds = array<i64: 1, 2>, scalar_prefetch = 0 : i64, scratch_operands = 1 : i64, tpu.core_type = #tpu.core_type<tc>, window_params = [{transform_indices = @transform_0, window_bounds = array<i64: 2, 8, 32>}, {pipeline_mode = #tpu.pipeline_mode<synchronous>, transform_indices = @transform_1, window_bounds = array<i64: 8, 32>}, {pipeline_mode = #tpu.pipeline_mode<synchronous>, transform_indices = @transform_2, window_bounds = array<i64: 2, 32>}, {transform_indices = @transform_3, window_bounds = array<i64: 1, 12, 32, 8>}, {transform_indices = @transform_4, window_bounds = array<i64: 1, 12, 1, 8>}, {transform_indices = @transform_5, window_bounds = array<i64: 1, 4, 8, 32>}, {transform_indices = @transform_6, window_bounds = array<i64: 1, 6, 32>}, {transform_indices = @transform_7, window_bounds = array<i64: 1, 32, 128>}, {transform_indices = @transform_8, window_bounds = array<i64: 1, 1, 128>}, {transform_indices = @transform_9, window_bounds = array<i64: 1, 128, 32>}, {transform_indices = @transform_10, window_bounds = array<i64: 2, 8, 32>}]} {
    %c0_i32 = arith.constant 0 : i32
    %0 = arith.cmpi eq, %arg1, %c0_i32 : i32
    %1 = arith.extui %0 : i1 to i32
    %c0_i32_0 = arith.constant 0 : i32
    %2 = arith.cmpi ne, %1, %c0_i32_0 : i32
    scf.if %2 {
      %c0_76 = arith.constant 0 : index
      %c0_77 = arith.constant 0 : index
      %c0_78 = arith.constant 0 : index
      %195 = vector.load %arg2[%c0_76, %c0_77, %c0_78] : memref<2x8x32xf32, #tpu.memory_space<vmem>>, vector<2x8x32xf32>
      %c0_79 = arith.constant 0 : index
      %c0_80 = arith.constant 0 : index
      %196 = vector.load %arg3[%c0_79, %c0_80] : memref<8x32xf32, #tpu.memory_space<vmem>>, vector<8x32xf32>
      %197 = vector.shape_cast %196 : vector<8x32xf32> to vector<1x8x32xf32>
      %198 = vector.broadcast %197 : vector<1x8x32xf32> to vector<2x8x32xf32>
      %199 = arith.addf %195, %198 : vector<2x8x32xf32>
      %c0_81 = arith.constant 0 : index
      %c0_82 = arith.constant 0 : index
      %c0_83 = arith.constant 0 : index
      %200 = vector.load %arg13[%c0_81, %c0_82, %c0_83] : memref<2x8x32xf32, #tpu.memory_space<vmem>>, vector<2x8x32xf32>
      tpu.vector_store %arg13[%c0_81, %c0_82, %c0_83], %199 {strides = array<i32>} : memref<2x8x32xf32, #tpu.memory_space<vmem>>, vector<2x8x32xf32>,
    } else {
    }
    %c0 = arith.constant 0 : index
    %c0_1 = arith.constant 0 : index
    %c0_2 = arith.constant 0 : index
    %3 = vector.load %arg13[%c0, %c0_1, %c0_2] : memref<2x8x32xf32, #tpu.memory_space<vmem>>, vector<2x8x32xf32>
    %c0_3 = arith.constant 0 : index
    %c0_4 = arith.constant 0 : index
    %c0_5 = arith.constant 0 : index
    %4 = vector.load %arg8[%c0_3, %c0_4, %c0_5] : memref<1x6x32xf32, #tpu.memory_space<vmem>>, vector<1x6x32xf32>
    %5 = vector.shape_cast %4 : vector<1x6x32xf32> to vector<6x32xf32>
    %6 = vector.extract_strided_slice %5 {offsets = [0, 0], sizes = [1, 32], strides = [1, 1]} : vector<6x32xf32> to vector<1x32xf32>
    %7 = vector.extract_strided_slice %5 {offsets = [1, 0], sizes = [1, 32], strides = [1, 1]} : vector<6x32xf32> to vector<1x32xf32>
    %8 = vector.extract_strided_slice %5 {offsets = [2, 0], sizes = [1, 32], strides = [1, 1]} : vector<6x32xf32> to vector<1x32xf32>
    %9 = vector.extract_strided_slice %5 {offsets = [3, 0], sizes = [1, 32], strides = [1, 1]} : vector<6x32xf32> to vector<1x32xf32>
    %10 = vector.extract_strided_slice %5 {offsets = [4, 0], sizes = [1, 32], strides = [1, 1]} : vector<6x32xf32> to vector<1x32xf32>
    %11 = vector.extract_strided_slice %5 {offsets = [5, 0], sizes = [1, 32], strides = [1, 1]} : vector<6x32xf32> to vector<1x32xf32>
    %cst = arith.constant dense<0.000000e+00> : vector<2x8xf32>
    %12 = vector.multi_reduction <add>, %3, %cst [2] : vector<2x8x32xf32> to vector<2x8xf32>
    %13 = vector.shape_cast %12 : vector<2x8xf32> to vector<2x8x1xf32>
    %cst_6 = arith.constant 3.200000e+01 : f32
    %14 = vector.broadcast %cst_6 : f32 to vector<2x8x1xf32>
    %15 = arith.divf %13, %14 : vector<2x8x1xf32>
    %16 = vector.broadcast %15 : vector<2x8x1xf32> to vector<2x8x32xf32>
    %17 = arith.subf %3, %16 : vector<2x8x32xf32>
    %18 = arith.mulf %17, %17 : vector<2x8x32xf32>
    %cst_7 = arith.constant dense<0.000000e+00> : vector<2x8xf32>
    %19 = vector.multi_reduction <add>, %18, %cst_7 [2] : vector<2x8x32xf32> to vector<2x8xf32>
    %20 = vector.shape_cast %19 : vector<2x8xf32> to vector<2x8x1xf32>
    %cst_8 = arith.constant 3.200000e+01 : f32
    %21 = vector.broadcast %cst_8 : f32 to vector<2x8x1xf32>
    %22 = arith.divf %20, %21 : vector<2x8x1xf32>
    %cst_9 = arith.constant 9.99999974E-6 : f32
    %23 = vector.broadcast %cst_9 : f32 to vector<2x8x1xf32>
    %24 = arith.addf %22, %23 : vector<2x8x1xf32>
    %25 = math.rsqrt %24 : vector<2x8x1xf32>
    %26 = vector.broadcast %25 : vector<2x8x1xf32> to vector<2x8x32xf32>
    %27 = arith.mulf %17, %26 : vector<2x8x32xf32>
    %28 = vector.shape_cast %6 : vector<1x32xf32> to vector<1x1x32xf32>
    %29 = vector.broadcast %28 : vector<1x1x32xf32> to vector<2x8x32xf32>
    %30 = arith.mulf %27, %29 : vector<2x8x32xf32>
    %31 = vector.shape_cast %7 : vector<1x32xf32> to vector<1x1x32xf32>
    %32 = vector.broadcast %31 : vector<1x1x32xf32> to vector<2x8x32xf32>
    %33 = arith.addf %30, %32 : vector<2x8x32xf32>
    %34 = arith.truncf %33 : vector<2x8x32xf32> to vector<2x8x32xbf16>
    %c0_10 = arith.constant 0 : index
    %c0_11 = arith.constant 0 : index
    %c0_12 = arith.constant 0 : index
    %c0_13 = arith.constant 0 : index
    %35 = vector.load %arg5[%c0_10, %c0_11, %c0_12, %c0_13] : memref<1x12x32x8xbf16, #tpu.memory_space<vmem>>, vector<1x12x32x8xbf16>
    %36 = vector.shape_cast %35 : vector<1x12x32x8xbf16> to vector<12x32x8xbf16>
    %c0_14 = arith.constant 0 : index
    %c0_15 = arith.constant 0 : index
    %c0_16 = arith.constant 0 : index
    %c0_17 = arith.constant 0 : index
    %37 = vector.load %arg6[%c0_14, %c0_15, %c0_16, %c0_17] : memref<1x12x1x8xf32, #tpu.memory_space<vmem>>, vector<1x12x1x8xf32>
    %38 = vector.shape_cast %37 : vector<1x12x1x8xf32> to vector<12x1x8xf32>
    %39 = vector.extract_strided_slice %36 {offsets = [0, 0, 0], sizes = [4, 32, 8], strides = [1, 1, 1]} : vector<12x32x8xbf16> to vector<4x32x8xbf16>
    %40 = vector.extract_strided_slice %36 {offsets = [4, 0, 0], sizes = [4, 32, 8], strides = [1, 1, 1]} : vector<12x32x8xbf16> to vector<4x32x8xbf16>
    %41 = vector.extract_strided_slice %36 {offsets = [8, 0, 0], sizes = [4, 32, 8], strides = [1, 1, 1]} : vector<12x32x8xbf16> to vector<4x32x8xbf16>
    %42 = vector.extract_strided_slice %38 {offsets = [0, 0, 0], sizes = [4, 1, 8], strides = [1, 1, 1]} : vector<12x1x8xf32> to vector<4x1x8xf32>
    %43 = vector.extract_strided_slice %38 {offsets = [4, 0, 0], sizes = [4, 1, 8], strides = [1, 1, 1]} : vector<12x1x8xf32> to vector<4x1x8xf32>
    %44 = vector.extract_strided_slice %38 {offsets = [8, 0, 0], sizes = [4, 1, 8], strides = [1, 1, 1]} : vector<12x1x8xf32> to vector<4x1x8xf32>
    %c0_18 = arith.constant 0 : index
    %c0_19 = arith.constant 0 : index
    %c0_20 = arith.constant 0 : index
    %c0_21 = arith.constant 0 : index
    %45 = vector.load %arg7[%c0_18, %c0_19, %c0_20, %c0_21] : memref<1x4x8x32xbf16, #tpu.memory_space<vmem>>, vector<1x4x8x32xbf16>
    %46 = vector.shape_cast %45 : vector<1x4x8x32xbf16> to vector<4x8x32xbf16>
    %47 = tpu.iota {dimensions = array<i32: 0>} : vector<8x8xi32>
    %48 = tpu.iota {dimensions = array<i32: 1>} : vector<8x8xi32>
    %49 = arith.cmpi sgt, %48, %47 : vector<8x8xi32>
    %cst_22 = arith.constant -1.000000e+09 : f32
    %cst_23 = arith.constant 0.000000e+00 : f32
    %50 = vector.broadcast %cst_22 : f32 to vector<8x8xf32>
    %51 = vector.broadcast %cst_23 : f32 to vector<8x8xf32>
    %52 = arith.select %49, %50, %51 : vector<8x8xi1>, vector<8x8xf32>
    %53 = vector.extract_strided_slice %34 {offsets = [0, 0, 0], sizes = [1, 8, 32], strides = [1, 1, 1]} : vector<2x8x32xbf16> to vector<1x8x32xbf16>
    %54 = vector.shape_cast %53 : vector<1x8x32xbf16> to vector<8x32xbf16>
    %55 = vector.shape_cast %54 : vector<8x32xbf16> to vector<1x8x32xbf16>
    %56 = vector.shape_cast %55 : vector<1x8x32xbf16> to vector<1x8x32xbf16>
    %57 = vector.broadcast %56 : vector<1x8x32xbf16> to vector<4x8x32xbf16>
    "tpu.trace_start"() <{level = 10 : i32, message = "hsd,hde->hse"}> : () -> ()
    %cst_24 = arith.constant dense<0.000000e+00> : vector<4x8x8xf32>
    %58 = tpu.matmul %57, %39, %cst_24 {dimension_numbers = #tpu.dot_dimension_numbers<[2], [1], [1], [2], [0, 0, 0, 1, 1, 2], [0], [0]>} : vector<4x8x32xbf16>, vector<4x32x8xbf16>, vector<4x8x8xf32> -> vector<4x8x8xf32>
    "tpu.trace_stop"() : () -> ()
    %59 = vector.broadcast %42 : vector<4x1x8xf32> to vector<4x8x8xf32>
    %60 = arith.addf %58, %59 : vector<4x8x8xf32>
    "tpu.trace_start"() <{level = 10 : i32, message = "hsd,hde->hse"}> : () -> ()
    %cst_25 = arith.constant dense<0.000000e+00> : vector<4x8x8xf32>
    %61 = tpu.matmul %57, %40, %cst_25 {dimension_numbers = #tpu.dot_dimension_numbers<[2], [1], [1], [2], [0, 0, 0, 1, 1, 2], [0], [0]>} : vector<4x8x32xbf16>, vector<4x32x8xbf16>, vector<4x8x8xf32> -> vector<4x8x8xf32>
    "tpu.trace_stop"() : () -> ()
    %62 = vector.broadcast %43 : vector<4x1x8xf32> to vector<4x8x8xf32>
    %63 = arith.addf %61, %62 : vector<4x8x8xf32>
    "tpu.trace_start"() <{level = 10 : i32, message = "hsd,hde->hse"}> : () -> ()
    %cst_26 = arith.constant dense<0.000000e+00> : vector<4x8x8xf32>
    %64 = tpu.matmul %57, %41, %cst_26 {dimension_numbers = #tpu.dot_dimension_numbers<[2], [1], [1], [2], [0, 0, 0, 1, 1, 2], [0], [0]>} : vector<4x8x32xbf16>, vector<4x32x8xbf16>, vector<4x8x8xf32> -> vector<4x8x8xf32>
    "tpu.trace_stop"() : () -> ()
    %65 = vector.broadcast %44 : vector<4x1x8xf32> to vector<4x8x8xf32>
    %66 = arith.addf %64, %65 : vector<4x8x8xf32>
    "tpu.trace_start"() <{level = 10 : i32, message = "hqe,hke->hqk"}> : () -> ()
    %cst_27 = arith.constant dense<0.000000e+00> : vector<4x8x8xf32>
    %67 = tpu.matmul %60, %63, %cst_27 {dimension_numbers = #tpu.dot_dimension_numbers<[2], [2], [1], [1], [0, 0, 0, 1, 1, 1], [0], [0]>} : vector<4x8x8xf32>, vector<4x8x8xf32>, vector<4x8x8xf32> -> vector<4x8x8xf32>
    "tpu.trace_stop"() : () -> ()
    %cst_28 = arith.constant 0.353553385 : f32
    %68 = vector.broadcast %cst_28 : f32 to vector<4x8x8xf32>
    %69 = arith.mulf %67, %68 : vector<4x8x8xf32>
    %70 = vector.shape_cast %52 : vector<8x8xf32> to vector<1x8x8xf32>
    %71 = vector.broadcast %70 : vector<1x8x8xf32> to vector<4x8x8xf32>
    %72 = arith.addf %69, %71 : vector<4x8x8xf32>
    %cst_29 = arith.constant dense<0xFF800000> : vector<4x8xf32>
    %73 = vector.multi_reduction <maximumf>, %72, %cst_29 [2] : vector<4x8x8xf32> to vector<4x8xf32>
    %74 = vector.shape_cast %73 : vector<4x8xf32> to vector<4x8x1xf32>
    %75 = vector.broadcast %74 : vector<4x8x1xf32> to vector<4x8x8xf32>
    %76 = arith.subf %72, %75 : vector<4x8x8xf32>
    %77 = math.exp %76 : vector<4x8x8xf32>
    %cst_30 = arith.constant dense<0.000000e+00> : vector<4x8xf32>
    %78 = vector.multi_reduction <add>, %77, %cst_30 [2] : vector<4x8x8xf32> to vector<4x8xf32>
    %79 = vector.shape_cast %78 : vector<4x8xf32> to vector<4x8x1xf32>
    %80 = tpu.reciprocal %79 {approx = true} : vector<4x8x1xf32> -> vector<4x8x1xf32>
    %81 = vector.broadcast %80 : vector<4x8x1xf32> to vector<4x8x8xf32>
    %82 = arith.mulf %77, %81 : vector<4x8x8xf32>
    "tpu.trace_start"() <{level = 10 : i32, message = "hqk,hke->hqe"}> : () -> ()
    %cst_31 = arith.constant dense<0.000000e+00> : vector<4x8x8xf32>
    %83 = tpu.matmul %82, %66, %cst_31 {dimension_numbers = #tpu.dot_dimension_numbers<[2], [1], [1], [2], [0, 0, 0, 1, 1, 2], [0], [0]>} : vector<4x8x8xf32>, vector<4x8x8xf32>, vector<4x8x8xf32> -> vector<4x8x8xf32>
    "tpu.trace_stop"() : () -> ()
    %84 = arith.truncf %83 : vector<4x8x8xf32> to vector<4x8x8xbf16>
    "tpu.trace_start"() <{level = 10 : i32, message = "hse,hed->hsd"}> : () -> ()
    %cst_32 = arith.constant dense<0.000000e+00> : vector<4x8x32xf32>
    %85 = tpu.matmul %84, %46, %cst_32 {dimension_numbers = #tpu.dot_dimension_numbers<[2], [1], [1], [2], [0, 0, 0, 1, 1, 2], [0], [0]>} : vector<4x8x8xbf16>, vector<4x8x32xbf16>, vector<4x8x32xf32> -> vector<4x8x32xf32>
    "tpu.trace_stop"() : () -> ()
    %86 = vector.extract_strided_slice %3 {offsets = [0, 0, 0], sizes = [1, 8, 32], strides = [1, 1, 1]} : vector<2x8x32xf32> to vector<1x8x32xf32>
    %87 = vector.shape_cast %86 : vector<1x8x32xf32> to vector<8x32xf32>
    %cst_33 = arith.constant dense<0.000000e+00> : vector<8x32xf32>
    %88 = vector.multi_reduction <add>, %85, %cst_33 [0] : vector<4x8x32xf32> to vector<8x32xf32>
    %89 = arith.addf %87, %88 : vector<8x32xf32>
    %90 = vector.broadcast %10 : vector<1x32xf32> to vector<8x32xf32>
    %91 = arith.addf %89, %90 : vector<8x32xf32>
    %c0_34 = arith.constant 0 : index
    %c0_35 = arith.constant 0 : index
    %c0_36 = arith.constant 0 : index
    %92 = vector.load %arg13[%c0_34, %c0_35, %c0_36] : memref<2x8x32xf32, #tpu.memory_space<vmem>>, vector<1x8x32xf32>
    %93 = vector.shape_cast %92 : vector<1x8x32xf32> to vector<8x32xf32>
    %94 = vector.shape_cast %91 : vector<8x32xf32> to vector<1x8x32xf32>
    tpu.vector_store %arg13[%c0_34, %c0_35, %c0_36], %94 {strides = array<i32>} : memref<2x8x32xf32, #tpu.memory_space<vmem>>, vector<1x8x32xf32>,
    %95 = vector.extract_strided_slice %34 {offsets = [1, 0, 0], sizes = [1, 8, 32], strides = [1, 1, 1]} : vector<2x8x32xbf16> to vector<1x8x32xbf16>
    %96 = vector.shape_cast %95 : vector<1x8x32xbf16> to vector<8x32xbf16>
    %97 = vector.shape_cast %96 : vector<8x32xbf16> to vector<1x8x32xbf16>
    %98 = vector.shape_cast %97 : vector<1x8x32xbf16> to vector<1x8x32xbf16>
    %99 = vector.broadcast %98 : vector<1x8x32xbf16> to vector<4x8x32xbf16>
    "tpu.trace_start"() <{level = 10 : i32, message = "hsd,hde->hse"}> : () -> ()
    %cst_37 = arith.constant dense<0.000000e+00> : vector<4x8x8xf32>
    %100 = tpu.matmul %99, %39, %cst_37 {dimension_numbers = #tpu.dot_dimension_numbers<[2], [1], [1], [2], [0, 0, 0, 1, 1, 2], [0], [0]>} : vector<4x8x32xbf16>, vector<4x32x8xbf16>, vector<4x8x8xf32> -> vector<4x8x8xf32>
    "tpu.trace_stop"() : () -> ()
    %101 = vector.broadcast %42 : vector<4x1x8xf32> to vector<4x8x8xf32>
    %102 = arith.addf %100, %101 : vector<4x8x8xf32>
    "tpu.trace_start"() <{level = 10 : i32, message = "hsd,hde->hse"}> : () -> ()
    %cst_38 = arith.constant dense<0.000000e+00> : vector<4x8x8xf32>
    %103 = tpu.matmul %99, %40, %cst_38 {dimension_numbers = #tpu.dot_dimension_numbers<[2], [1], [1], [2], [0, 0, 0, 1, 1, 2], [0], [0]>} : vector<4x8x32xbf16>, vector<4x32x8xbf16>, vector<4x8x8xf32> -> vector<4x8x8xf32>
    "tpu.trace_stop"() : () -> ()
    %104 = vector.broadcast %43 : vector<4x1x8xf32> to vector<4x8x8xf32>
    %105 = arith.addf %103, %104 : vector<4x8x8xf32>
    "tpu.trace_start"() <{level = 10 : i32, message = "hsd,hde->hse"}> : () -> ()
    %cst_39 = arith.constant dense<0.000000e+00> : vector<4x8x8xf32>
    %106 = tpu.matmul %99, %41, %cst_39 {dimension_numbers = #tpu.dot_dimension_numbers<[2], [1], [1], [2], [0, 0, 0, 1, 1, 2], [0], [0]>} : vector<4x8x32xbf16>, vector<4x32x8xbf16>, vector<4x8x8xf32> -> vector<4x8x8xf32>
    "tpu.trace_stop"() : () -> ()
    %107 = vector.broadcast %44 : vector<4x1x8xf32> to vector<4x8x8xf32>
    %108 = arith.addf %106, %107 : vector<4x8x8xf32>
    "tpu.trace_start"() <{level = 10 : i32, message = "hqe,hke->hqk"}> : () -> ()
    %cst_40 = arith.constant dense<0.000000e+00> : vector<4x8x8xf32>
    %109 = tpu.matmul %102, %105, %cst_40 {dimension_numbers = #tpu.dot_dimension_numbers<[2], [2], [1], [1], [0, 0, 0, 1, 1, 1], [0], [0]>} : vector<4x8x8xf32>, vector<4x8x8xf32>, vector<4x8x8xf32> -> vector<4x8x8xf32>
    "tpu.trace_stop"() : () -> ()
    %cst_41 = arith.constant 0.353553385 : f32
    %110 = vector.broadcast %cst_41 : f32 to vector<4x8x8xf32>
    %111 = arith.mulf %109, %110 : vector<4x8x8xf32>
    %112 = vector.shape_cast %52 : vector<8x8xf32> to vector<1x8x8xf32>
    %113 = vector.broadcast %112 : vector<1x8x8xf32> to vector<4x8x8xf32>
    %114 = arith.addf %111, %113 : vector<4x8x8xf32>
    %cst_42 = arith.constant dense<0xFF800000> : vector<4x8xf32>
    %115 = vector.multi_reduction <maximumf>, %114, %cst_42 [2] : vector<4x8x8xf32> to vector<4x8xf32>
    %116 = vector.shape_cast %115 : vector<4x8xf32> to vector<4x8x1xf32>
    %117 = vector.broadcast %116 : vector<4x8x1xf32> to vector<4x8x8xf32>
    %118 = arith.subf %114, %117 : vector<4x8x8xf32>
    %119 = math.exp %118 : vector<4x8x8xf32>
    %cst_43 = arith.constant dense<0.000000e+00> : vector<4x8xf32>
    %120 = vector.multi_reduction <add>, %119, %cst_43 [2] : vector<4x8x8xf32> to vector<4x8xf32>
    %121 = vector.shape_cast %120 : vector<4x8xf32> to vector<4x8x1xf32>
    %122 = tpu.reciprocal %121 {approx = true} : vector<4x8x1xf32> -> vector<4x8x1xf32>
    %123 = vector.broadcast %122 : vector<4x8x1xf32> to vector<4x8x8xf32>
    %124 = arith.mulf %119, %123 : vector<4x8x8xf32>
    "tpu.trace_start"() <{level = 10 : i32, message = "hqk,hke->hqe"}> : () -> ()
    %cst_44 = arith.constant dense<0.000000e+00> : vector<4x8x8xf32>
    %125 = tpu.matmul %124, %108, %cst_44 {dimension_numbers = #tpu.dot_dimension_numbers<[2], [1], [1], [2], [0, 0, 0, 1, 1, 2], [0], [0]>} : vector<4x8x8xf32>, vector<4x8x8xf32>, vector<4x8x8xf32> -> vector<4x8x8xf32>
    "tpu.trace_stop"() : () -> ()
    %126 = arith.truncf %125 : vector<4x8x8xf32> to vector<4x8x8xbf16>
    "tpu.trace_start"() <{level = 10 : i32, message = "hse,hed->hsd"}> : () -> ()
    %cst_45 = arith.constant dense<0.000000e+00> : vector<4x8x32xf32>
    %127 = tpu.matmul %126, %46, %cst_45 {dimension_numbers = #tpu.dot_dimension_numbers<[2], [1], [1], [2], [0, 0, 0, 1, 1, 2], [0], [0]>} : vector<4x8x8xbf16>, vector<4x8x32xbf16>, vector<4x8x32xf32> -> vector<4x8x32xf32>
    "tpu.trace_stop"() : () -> ()
    %128 = vector.extract_strided_slice %3 {offsets = [1, 0, 0], sizes = [1, 8, 32], strides = [1, 1, 1]} : vector<2x8x32xf32> to vector<1x8x32xf32>
    %129 = vector.shape_cast %128 : vector<1x8x32xf32> to vector<8x32xf32>
    %cst_46 = arith.constant dense<0.000000e+00> : vector<8x32xf32>
    %130 = vector.multi_reduction <add>, %127, %cst_46 [0] : vector<4x8x32xf32> to vector<8x32xf32>
    %131 = arith.addf %129, %130 : vector<8x32xf32>
    %132 = vector.broadcast %10 : vector<1x32xf32> to vector<8x32xf32>
    %133 = arith.addf %131, %132 : vector<8x32xf32>
    %c1 = arith.constant 1 : index
    %c0_47 = arith.constant 0 : index
    %c0_48 = arith.constant 0 : index
    %134 = vector.load %arg13[%c1, %c0_47, %c0_48] : memref<2x8x32xf32, #tpu.memory_space<vmem>>, vector<1x8x32xf32>
    %135 = vector.shape_cast %134 : vector<1x8x32xf32> to vector<8x32xf32>
    %136 = vector.shape_cast %133 : vector<8x32xf32> to vector<1x8x32xf32>
    tpu.vector_store %arg13[%c1, %c0_47, %c0_48], %136 {strides = array<i32>} : memref<2x8x32xf32, #tpu.memory_space<vmem>>, vector<1x8x32xf32>,
    %c0_49 = arith.constant 0 : index
    %c0_50 = arith.constant 0 : index
    %c0_51 = arith.constant 0 : index
    %137 = vector.load %arg13[%c0_49, %c0_50, %c0_51] : memref<2x8x32xf32, #tpu.memory_space<vmem>>, vector<2x8x32xf32>
    %cst_52 = arith.constant dense<0.000000e+00> : vector<2x8xf32>
    %138 = vector.multi_reduction <add>, %137, %cst_52 [2] : vector<2x8x32xf32> to vector<2x8xf32>
    %139 = vector.shape_cast %138 : vector<2x8xf32> to vector<2x8x1xf32>
    %cst_53 = arith.constant 3.200000e+01 : f32
    %140 = vector.broadcast %cst_53 : f32 to vector<2x8x1xf32>
    %141 = arith.divf %139, %140 : vector<2x8x1xf32>
    %142 = vector.broadcast %141 : vector<2x8x1xf32> to vector<2x8x32xf32>
    %143 = arith.subf %137, %142 : vector<2x8x32xf32>
    %144 = arith.mulf %143, %143 : vector<2x8x32xf32>
    %cst_54 = arith.constant dense<0.000000e+00> : vector<2x8xf32>
    %145 = vector.multi_reduction <add>, %144, %cst_54 [2] : vector<2x8x32xf32> to vector<2x8xf32>
    %146 = vector.shape_cast %145 : vector<2x8xf32> to vector<2x8x1xf32>
    %cst_55 = arith.constant 3.200000e+01 : f32
    %147 = vector.broadcast %cst_55 : f32 to vector<2x8x1xf32>
    %148 = arith.divf %146, %147 : vector<2x8x1xf32>
    %cst_56 = arith.constant 9.99999974E-6 : f32
    %149 = vector.broadcast %cst_56 : f32 to vector<2x8x1xf32>
    %150 = arith.addf %148, %149 : vector<2x8x1xf32>
    %151 = math.rsqrt %150 : vector<2x8x1xf32>
    %152 = vector.broadcast %151 : vector<2x8x1xf32> to vector<2x8x32xf32>
    %153 = arith.mulf %143, %152 : vector<2x8x32xf32>
    %154 = vector.shape_cast %8 : vector<1x32xf32> to vector<1x1x32xf32>
    %155 = vector.broadcast %154 : vector<1x1x32xf32> to vector<2x8x32xf32>
    %156 = arith.mulf %153, %155 : vector<2x8x32xf32>
    %157 = vector.shape_cast %9 : vector<1x32xf32> to vector<1x1x32xf32>
    %158 = vector.broadcast %157 : vector<1x1x32xf32> to vector<2x8x32xf32>
    %159 = arith.addf %156, %158 : vector<2x8x32xf32>
    %160 = vector.shape_cast %159 : vector<2x8x32xf32> to vector<16x32xf32>
    %161 = arith.truncf %160 : vector<16x32xf32> to vector<16x32xbf16>
    %c0_57 = arith.constant 0 : index
    %c0_58 = arith.constant 0 : index
    %c0_59 = arith.constant 0 : index
    %162 = vector.load %arg9[%c0_57, %c0_58, %c0_59] : memref<1x32x128xbf16, #tpu.memory_space<vmem>>, vector<1x32x128xbf16>
    %163 = vector.shape_cast %162 : vector<1x32x128xbf16> to vector<32x128xbf16>
    %cst_60 = arith.constant dense<0.000000e+00> : vector<16x128xf32>
    %164 = tpu.matmul %161, %163, %cst_60 {dimension_numbers = #tpu.dot_dimension_numbers<[1], [0], [0], [1], [0, 0, 1, 1], [], []>} : vector<16x32xbf16>, vector<32x128xbf16>, vector<16x128xf32> -> vector<16x128xf32>
    %c0_61 = arith.constant 0 : index
    %c0_62 = arith.constant 0 : index
    %c0_63 = arith.constant 0 : index
    %165 = vector.load %arg10[%c0_61, %c0_62, %c0_63] : memref<1x1x128xf32, #tpu.memory_space<vmem>>, vector<1x1x128xf32>
    %166 = vector.shape_cast %165 : vector<1x1x128xf32> to vector<1x128xf32>
    %167 = vector.broadcast %166 : vector<1x128xf32> to vector<16x128xf32>
    %168 = arith.addf %164, %167 : vector<16x128xf32>
    %169 = arith.mulf %168, %168 : vector<16x128xf32>
    %170 = arith.mulf %168, %169 : vector<16x128xf32>
    %cst_64 = arith.constant 4.471500e-02 : f32
    %171 = vector.broadcast %cst_64 : f32 to vector<16x128xf32>
    %172 = arith.mulf %171, %170 : vector<16x128xf32>
    %173 = arith.addf %168, %172 : vector<16x128xf32>
    %cst_65 = arith.constant 0.797884583 : f32
    %174 = vector.broadcast %cst_65 : f32 to vector<16x128xf32>
    %175 = arith.mulf %174, %173 : vector<16x128xf32>
    %176 = math.tanh %175 : vector<16x128xf32>
    %cst_66 = arith.constant 1.000000e+00 : f32
    %177 = vector.broadcast %cst_66 : f32 to vector<16x128xf32>
    %178 = arith.addf %177, %176 : vector<16x128xf32>
    %cst_67 = arith.constant 5.000000e-01 : f32
    %179 = vector.broadcast %cst_67 : f32 to vector<16x128xf32>
    %180 = arith.mulf %179, %178 : vector<16x128xf32>
    %181 = arith.mulf %168, %180 : vector<16x128xf32>
    %182 = arith.truncf %181 : vector<16x128xf32> to vector<16x128xbf16>
    %c0_68 = arith.constant 0 : index
    %c0_69 = arith.constant 0 : index
    %c0_70 = arith.constant 0 : index
    %183 = vector.load %arg11[%c0_68, %c0_69, %c0_70] : memref<1x128x32xbf16, #tpu.memory_space<vmem>>, vector<1x128x32xbf16>
    %184 = vector.shape_cast %183 : vector<1x128x32xbf16> to vector<128x32xbf16>
    %cst_71 = arith.constant dense<0.000000e+00> : vector<16x32xf32>
    %185 = tpu.matmul %182, %184, %cst_71 {dimension_numbers = #tpu.dot_dimension_numbers<[1], [0], [0], [1], [0, 0, 1, 1], [], []>} : vector<16x128xbf16>, vector<128x32xbf16>, vector<16x32xf32> -> vector<16x32xf32>
    %186 = vector.shape_cast %185 : vector<16x32xf32> to vector<2x8x32xf32>
    %187 = arith.addf %137, %186 : vector<2x8x32xf32>
    %188 = vector.shape_cast %11 : vector<1x32xf32> to vector<1x1x32xf32>
    %189 = vector.broadcast %188 : vector<1x1x32xf32> to vector<2x8x32xf32>
    %190 = arith.addf %187, %189 : vector<2x8x32xf32>
    %c0_72 = arith.constant 0 : index
    %c0_73 = arith.constant 0 : index
    %c0_74 = arith.constant 0 : index
    %191 = vector.load %arg13[%c0_72, %c0_73, %c0_74] : memref<2x8x32xf32, #tpu.memory_space<vmem>>, vector<2x8x32xf32>
    tpu.vector_store %arg13[%c0_72, %c0_73, %c0_74], %190 {strides = array<i32>} : memref<2x8x32xf32, #tpu.memory_space<vmem>>, vector<2x8x32xf32>,
    %c1_i32 = arith.constant 1 : i32
    %192 = arith.cmpi eq, %arg1, %c1_i32 : i32
    %193 = arith.extui %192 : i1 to i32
    %c0_i32_75 = arith.constant 0 : i32
    %194 = arith.cmpi ne, %193, %c0_i32_75 : i32
    scf.if %194 {
      %c0_76 = arith.constant 0 : index
      %c0_77 = arith.constant 0 : index
      %195 = vector.load %arg4[%c0_76, %c0_77] : memref<2x32xf32, #tpu.memory_space<vmem>>, vector<2x32xf32>
      %196 = vector.extract_strided_slice %195 {offsets = [0, 0], sizes = [1, 32], strides = [1, 1]} : vector<2x32xf32> to vector<1x32xf32>
      %197 = vector.extract_strided_slice %195 {offsets = [1, 0], sizes = [1, 32], strides = [1, 1]} : vector<2x32xf32> to vector<1x32xf32>
      %cst_78 = arith.constant dense<0.000000e+00> : vector<2x8xf32>
      %198 = vector.multi_reduction <add>, %190, %cst_78 [2] : vector<2x8x32xf32> to vector<2x8xf32>
      %199 = vector.shape_cast %198 : vector<2x8xf32> to vector<2x8x1xf32>
      %cst_79 = arith.constant 3.200000e+01 : f32
      %200 = vector.broadcast %cst_79 : f32 to vector<2x8x1xf32>
      %201 = arith.divf %199, %200 : vector<2x8x1xf32>
      %202 = vector.broadcast %201 : vector<2x8x1xf32> to vector<2x8x32xf32>
      %203 = arith.subf %190, %202 : vector<2x8x32xf32>
      %204 = arith.mulf %203, %203 : vector<2x8x32xf32>
      %cst_80 = arith.constant dense<0.000000e+00> : vector<2x8xf32>
      %205 = vector.multi_reduction <add>, %204, %cst_80 [2] : vector<2x8x32xf32> to vector<2x8xf32>
      %206 = vector.shape_cast %205 : vector<2x8xf32> to vector<2x8x1xf32>
      %cst_81 = arith.constant 3.200000e+01 : f32
      %207 = vector.broadcast %cst_81 : f32 to vector<2x8x1xf32>
      %208 = arith.divf %206, %207 : vector<2x8x1xf32>
      %cst_82 = arith.constant 9.99999974E-6 : f32
      %209 = vector.broadcast %cst_82 : f32 to vector<2x8x1xf32>
      %210 = arith.addf %208, %209 : vector<2x8x1xf32>
      %211 = math.rsqrt %210 : vector<2x8x1xf32>
      %212 = vector.broadcast %211 : vector<2x8x1xf32> to vector<2x8x32xf32>
      %213 = arith.mulf %203, %212 : vector<2x8x32xf32>
      %214 = vector.shape_cast %196 : vector<1x32xf32> to vector<1x1x32xf32>
      %215 = vector.broadcast %214 : vector<1x1x32xf32> to vector<2x8x32xf32>
      %216 = arith.mulf %213, %215 : vector<2x8x32xf32>
      %217 = vector.shape_cast %197 : vector<1x32xf32> to vector<1x1x32xf32>
      %218 = vector.broadcast %217 : vector<1x1x32xf32> to vector<2x8x32xf32>
      %219 = arith.addf %216, %218 : vector<2x8x32xf32>
      %c0_83 = arith.constant 0 : index
      %c0_84 = arith.constant 0 : index
      %c0_85 = arith.constant 0 : index
      %220 = vector.load %arg12[%c0_83, %c0_84, %c0_85] : memref<2x8x32xf32, #tpu.memory_space<vmem>>, vector<2x8x32xf32>
      tpu.vector_store %arg12[%c0_83, %c0_84, %c0_85], %219 {strides = array<i32>} : memref<2x8x32xf32, #tpu.memory_space<vmem>>, vector<2x8x32xf32>,
    } else {
    }
    return
  }
  func.func @transform_0(%arg0: i32, %arg1: i32) -> (i32, i32, i32) {
    %c0_i32 = arith.constant 0 : i32
    %c0_i32_0 = arith.constant 0 : i32
    %c0_i32_1 = arith.constant 0 : i32
    return %arg0, %c0_i32, %c0_i32_0 : i32, i32, i32
  }
  func.func @transform_1(%arg0: i32, %arg1: i32) -> (i32, i32) {
    %c0_i32 = arith.constant 0 : i32
    %c0_i32_0 = arith.constant 0 : i32
    %c0_i32_1 = arith.constant 0 : i32
    return %c0_i32, %c0_i32_0 : i32, i32
  }
  func.func @transform_2(%arg0: i32, %arg1: i32) -> (i32, i32) {
    %c0_i32 = arith.constant 0 : i32
    %c0_i32_0 = arith.constant 0 : i32
    %c0_i32_1 = arith.constant 0 : i32
    return %c0_i32, %c0_i32_0 : i32, i32
  }
  func.func @transform_3(%arg0: i32, %arg1: i32) -> (i32, i32, i32, i32) {
    %c0_i32 = arith.constant 0 : i32
    %c0_i32_0 = arith.constant 0 : i32
    %c0_i32_1 = arith.constant 0 : i32
    %c0_i32_2 = arith.constant 0 : i32
    return %arg1, %c0_i32, %c0_i32_0, %c0_i32_1 : i32, i32, i32, i32
  }
  func.func @transform_4(%arg0: i32, %arg1: i32) -> (i32, i32, i32, i32) {
    %c0_i32 = arith.constant 0 : i32
    %c0_i32_0 = arith.constant 0 : i32
    %c0_i32_1 = arith.constant 0 : i32
    %c0_i32_2 = arith.constant 0 : i32
    return %arg1, %c0_i32, %c0_i32_0, %c0_i32_1 : i32, i32, i32, i32
  }
  func.func @transform_5(%arg0: i32, %arg1: i32) -> (i32, i32, i32, i32) {
    %c0_i32 = arith.constant 0 : i32
    %c0_i32_0 = arith.constant 0 : i32
    %c0_i32_1 = arith.constant 0 : i32
    %c0_i32_2 = arith.constant 0 : i32
    return %arg1, %c0_i32, %c0_i32_0, %c0_i32_1 : i32, i32, i32, i32
  }
  func.func @transform_6(%arg0: i32, %arg1: i32) -> (i32, i32, i32) {
    %c0_i32 = arith.constant 0 : i32
    %c0_i32_0 = arith.constant 0 : i32
    %c0_i32_1 = arith.constant 0 : i32
    return %arg1, %c0_i32, %c0_i32_0 : i32, i32, i32
  }
  func.func @transform_7(%arg0: i32, %arg1: i32) -> (i32, i32, i32) {
    %c0_i32 = arith.constant 0 : i32
    %c0_i32_0 = arith.constant 0 : i32
    %c0_i32_1 = arith.constant 0 : i32
    return %arg1, %c0_i32, %c0_i32_0 : i32, i32, i32
  }
  func.func @transform_8(%arg0: i32, %arg1: i32) -> (i32, i32, i32) {
    %c0_i32 = arith.constant 0 : i32
    %c0_i32_0 = arith.constant 0 : i32
    %c0_i32_1 = arith.constant 0 : i32
    return %arg1, %c0_i32, %c0_i32_0 : i32, i32, i32
  }
  func.func @transform_9(%arg0: i32, %arg1: i32) -> (i32, i32, i32) {
    %c0_i32 = arith.constant 0 : i32
    %c0_i32_0 = arith.constant 0 : i32
    %c0_i32_1 = arith.constant 0 : i32
    return %arg1, %c0_i32, %c0_i32_0 : i32, i32, i32
  }
  func.func @transform_10(%arg0: i32, %arg1: i32) -> (i32, i32, i32) {
    %c0_i32 = arith.constant 0 : i32
    %c0_i32_0 = arith.constant 0 : i32
    %c0_i32_1 = arith.constant 0 : i32
    return %arg0, %c0_i32, %c0_i32_0 : i32, i32, i32
  }
}

</mosaic_0001>

<llo_original>
// kernel: clip_text_forward.1
$region0: #{clip_text_forward.1}
  #allocation0 [shape = 'u32[]', space=smem, size = 0x4, offset = 0x4, fixed_abs, tag = 'smem constant byte address 0x4 - core index']
  #allocation1 [shape = 'u32[72,128]{1,0:T(1,128)}', space=vmem, size = 0x9000, scoped, tag = 'internal scratch']
  #allocation2 [shape = 'f32[2,8,32]{2,1,0:T(8,128)}', space=vmem, size = 0x2000, scoped, tag = 'scratch operand']
  %s0 = inlined_call_operand.vmem [shape: f32[2,8,32], index: 0, kind: input, shape index: {}]
  %s1 = inlined_call_operand.vmem [shape: f32[8,32], index: 1, kind: input, shape index: {}]
  %s2 = inlined_call_operand.vmem [shape: f32[2,32], index: 2, kind: input, shape index: {}]
  %s3 = inlined_call_operand.vmem [shape: bf16[2,12,32,8], index: 3, kind: input, shape index: {}]
  %s4 = inlined_call_operand.vmem [shape: f32[2,12,1,8], index: 4, kind: input, shape index: {}]
  %s5 = inlined_call_operand.vmem [shape: bf16[2,4,8,32], index: 5, kind: input, shape index: {}]
  %s6 = inlined_call_operand.vmem [shape: f32[2,6,32], index: 6, kind: input, shape index: {}]
  %s7 = inlined_call_operand.vmem [shape: bf16[2,32,128], index: 7, kind: input, shape index: {}]
  %s8 = inlined_call_operand.vmem [shape: f32[2,1,128], index: 8, kind: input, shape index: {}]
  %s9 = inlined_call_operand.vmem [shape: bf16[2,128,32], index: 9, kind: input, shape index: {}]
  %s10 = inlined_call_operand.hbm [shape: f32[2,8,32], index: 10, kind: output, shape index: {}]
  %s11 = sld [smem:[#allocation0]]
  $region81: #{clip_text_forward.1} parent=0
    _
  %s13 = ssub.s32 1, %s11
  %s14 = scalar_select 0, %s13, %s11
  $region1: #{clip_text_forward.1} parent=0
    #allocation3 [shape = 'u8[8192]{0}', space=vmem, size = 0x2000, scoped, tag = 'output window, operand 0, single buffered']
    #allocation4 [shape = 's32[2]{0}', space=sflag, size = 0x8, scoped, tag = 'scoped memory for clip_text_forward.1']
    %15 = vsyncpa [#allocation4], 0
    loop: start=0, step=1, limit=4
    $region2: #{clip_text_forward.1} parent=1 // loop_pre_header
      _
    $region3: #{clip_text_forward.1} parent=1 // loop_header
      %s17 = sphi 0, %s21
      %p18 = scmp.ge.s32.totalorder %s17, 4
      %s24 = sphi 0, %s36
      %s25 = sphi 0, %s32
      %s26 = sphi 0, %s24
      %s27 = sphi 0, %s25
      %s28 = sphi 0, %s26
      %s29 = sphi 0, %s27
      %s39 = sphi 0, %s41
      %s42 = sphi 0, %s39
      %s43 = sphi 0, %s42
      %s59 = sphi 0, %s43
      %s63 = sphi 0, %s63
      %s65 = sphi 0, %s63
      %s66 = sphi 0, %s65
      %s80 = sphi 0, %s66
      %s84 = sphi 0, %s84
      %s86 = sphi 0, %s84
      %s87 = sphi 0, %s86
      %s101 = sphi 0, %s87
      %s107 = sphi 0, %s109
      %s110 = sphi 0, %s107
      %s111 = sphi 0, %s110
      %s127 = sphi 0, %s111
      %s133 = sphi 0, %s135
      %s136 = sphi 0, %s133
      %s137 = sphi 0, %s136
      %s153 = sphi 0, %s137
      %s159 = sphi 0, %s161
      %s162 = sphi 0, %s159
      %s163 = sphi 0, %s162
      %s179 = sphi 0, %s163
      %s185 = sphi 0, %s187
      %s188 = sphi 0, %s185
      %s189 = sphi 0, %s188
      %s205 = sphi 0, %s189
      %s211 = sphi 0, %s213
      %s214 = sphi 0, %s211
      %s215 = sphi 0, %s214
      %s231 = sphi 0, %s215
      %s237 = sphi 0, %s239
      %s240 = sphi 0, %s237
      %s241 = sphi 0, %s240
      %s257 = sphi 0, %s241
      %s263 = sphi 0, %s265
      %s266 = sphi 0, %s263
      %s267 = sphi 0, %s266
      %s283 = sphi 0, %s267
      %s289 = sphi 0, %s291
      %s292 = sphi 0, %s289
      %s293 = sphi 0, %s292
      %s309 = sphi 0, %s293
    $region4: #{clip_text_forward.1} parent=1 // loop_header_branch
      %20 = sbr.rel (%p18) target = $region8
    $region5: #{clip_text_forward.1} parent=1 // loop_body
      %s22 = ssub.s32 %s17, 1
      %s23 = ssub.s32 %s17, 2
      %s30 = sadd.s32 1, %s25
      %p31 = scmp.ge.s32.totalorder %s30, 2
      %s32 = scalar_select %p31, 0, %s30
      %s33 = sadd.s32 1, %s24
      %s34 = scalar_select %p31, %s33, %s24
      %p35 = scmp.ge.s32.totalorder %s34, 1
      %s36 = scalar_select %p35, 0, %s34
      %s37 = ssub.s32 %s24, %s36
      %p38 = scmp.eq.s32.totalorder %s37, 0
      %s40 = sadd.s32 %s39, 1
      %s41 = scalar_select %p38, %s39, %s40
      %p44 = pneg %p38
      %p45 = scmp.eq.s32.totalorder %s17, 1
      %p46 = por %p44, %p45
      %p47 = scmp.ne.s32.totalorder %s39, %s42
      %p48 = scmp.eq.s32.totalorder %s17, 0
      %p49 = por %p47, %p48
      %p50 = scmp.ne.s32.totalorder %s39, %s42
      %p51 = scmp.eq.s32.totalorder %s22, 1
      %p52 = por %p50, %p51
      %p53 = scmp.ne.s32.totalorder %s42, %s43
      %p54 = scmp.eq.s32.totalorder %s22, 0
      %p55 = por %p53, %p54
      %p56 = scmp.ne.s32.totalorder %s42, %s43
      %p57 = scmp.eq.s32.totalorder %s23, 1
      %p58 = por %p56, %p57
      %p60 = scmp.ne.s32.totalorder %s43, %s59
      %p61 = scmp.eq.s32.totalorder %s23, 0
      %p62 = por %p60, %p61
      %s64 = sadd.s32 %s63, 1
      %p67 = scmp.eq.s32.totalorder %s17, 1
      %p68 = scmp.ne.s32.totalorder %s63, %s65
      %p69 = scmp.eq.s32.totalorder %s17, 0
      %p70 = por %p68, %p69
      %p71 = scmp.ne.s32.totalorder %s63, %s65
      %p72 = scmp.eq.s32.totalorder %s22, 1
      %p73 = por %p71, %p72
      %p74 = scmp.ne.s32.totalorder %s65, %s66
      %p75 = scmp.eq.s32.totalorder %s22, 0
      %p76 = por %p74, %p75
      %p77 = scmp.ne.s32.totalorder %s65, %s66
      %p78 = scmp.eq.s32.totalorder %s23, 1
      %p79 = por %p77, %p78
      %p81 = scmp.ne.s32.totalorder %s66, %s80
      %p82 = scmp.eq.s32.totalorder %s23, 0
      %p83 = por %p81, %p82
      %s85 = sadd.s32 %s84, 1
      %p88 = scmp.eq.s32.totalorder %s17, 1
      %p89 = scmp.ne.s32.totalorder %s84, %s86
      %p90 = scmp.eq.s32.totalorder %s17, 0
      %p91 = por %p89, %p90
      %p92 = scmp.ne.s32.totalorder %s84, %s86
      %p93 = scmp.eq.s32.totalorder %s22, 1
      %p94 = por %p92, %p93
      %p95 = scmp.ne.s32.totalorder %s86, %s87
      %p96 = scmp.eq.s32.totalorder %s22, 0
      %p97 = por %p95, %p96
      %p98 = scmp.ne.s32.totalorder %s86, %s87
      %p99 = scmp.eq.s32.totalorder %s23, 1
      %p100 = por %p98, %p99
      %p102 = scmp.ne.s32.totalorder %s87, %s101
      %p103 = scmp.eq.s32.totalorder %s23, 0
      %p104 = por %p102, %p103
      %s105 = ssub.s32 %s25, %s32
      %p106 = scmp.eq.s32.totalorder %s105, 0
      %s108 = sadd.s32 %s107, 1
      %s109 = scalar_select %p106, %s107, %s108
      %p112 = pneg %p106
      %p113 = scmp.eq.s32.totalorder %s17, 1
      %p114 = por %p112, %p113
      %p115 = scmp.ne.s32.totalorder %s107, %s110
      %p116 = scmp.eq.s32.totalorder %s17, 0
      %p117 = por %p115, %p116
      %p118 = scmp.ne.s32.totalorder %s107, %s110
      %p119 = scmp.eq.s32.totalorder %s22, 1
      %p120 = por %p118, %p119
      %p121 = scmp.ne.s32.totalorder %s110, %s111
      %p122 = scmp.eq.s32.totalorder %s22, 0
      %p123 = por %p121, %p122
      %p124 = scmp.ne.s32.totalorder %s110, %s111
      %p125 = scmp.eq.s32.totalorder %s23, 1
      %p126 = por %p124, %p125
      %p128 = scmp.ne.s32.totalorder %s111, %s127
      %p129 = scmp.eq.s32.totalorder %s23, 0
      %p130 = por %p128, %p129
      %s131 = ssub.s32 %s25, %s32
      %p132 = scmp.eq.s32.totalorder %s131, 0
      %s134 = sadd.s32 %s133, 1
      %s135 = scalar_select %p132, %s133, %s134
      %p138 = pneg %p132
      %p139 = scmp.eq.s32.totalorder %s17, 1
      %p140 = por %p138, %p139
      %p141 = scmp.ne.s32.totalorder %s133, %s136
      %p142 = scmp.eq.s32.totalorder %s17, 0
      %p143 = por %p141, %p142
      %p144 = scmp.ne.s32.totalorder %s133, %s136
      %p145 = scmp.eq.s32.totalorder %s22, 1
      %p146 = por %p144, %p145
      %p147 = scmp.ne.s32.totalorder %s136, %s137
      %p148 = scmp.eq.s32.totalorder %s22, 0
      %p149 = por %p147, %p148
      %p150 = scmp.ne.s32.totalorder %s136, %s137
      %p151 = scmp.eq.s32.totalorder %s23, 1
      %p152 = por %p150, %p151
      %p154 = scmp.ne.s32.totalorder %s137, %s153
      %p155 = scmp.eq.s32.totalorder %s23, 0
      %p156 = por %p154, %p155
      %s157 = ssub.s32 %s25, %s32
      %p158 = scmp.eq.s32.totalorder %s157, 0
      %s160 = sadd.s32 %s159, 1
      %s161 = scalar_select %p158, %s159, %s160
      %p164 = pneg %p158
      %p165 = scmp.eq.s32.totalorder %s17, 1
      %p166 = por %p164, %p165
      %p167 = scmp.ne.s32.totalorder %s159, %s162
      %p168 = scmp.eq.s32.totalorder %s17, 0
      %p169 = por %p167, %p168
      %p170 = scmp.ne.s32.totalorder %s159, %s162
      %p171 = scmp.eq.s32.totalorder %s22, 1
      %p172 = por %p170, %p171
      %p173 = scmp.ne.s32.totalorder %s162, %s163
      %p174 = scmp.eq.s32.totalorder %s22, 0
      %p175 = por %p173, %p174
      %p176 = scmp.ne.s32.totalorder %s162, %s163
      %p177 = scmp.eq.s32.totalorder %s23, 1
      %p178 = por %p176, %p177
      %p180 = scmp.ne.s32.totalorder %s163, %s179
      %p181 = scmp.eq.s32.totalorder %s23, 0
      %p182 = por %p180, %p181
      %s183 = ssub.s32 %s25, %s32
      %p184 = scmp.eq.s32.totalorder %s183, 0
      %s186 = sadd.s32 %s185, 1
      %s187 = scalar_select %p184, %s185, %s186
      %p190 = pneg %p184
      %p191 = scmp.eq.s32.totalorder %s17, 1
      %p192 = por %p190, %p191
      %p193 = scmp.ne.s32.totalorder %s185, %s188
      %p194 = scmp.eq.s32.totalorder %s17, 0
      %p195 = por %p193, %p194
      %p196 = scmp.ne.s32.totalorder %s185, %s188
      %p197 = scmp.eq.s32.totalorder %s22, 1
      %p198 = por %p196, %p197
      %p199 = scmp.ne.s32.totalorder %s188, %s189
      %p200 = scmp.eq.s32.totalorder %s22, 0
      %p201 = por %p199, %p200
      %p202 = scmp.ne.s32.totalorder %s188, %s189
      %p203 = scmp.eq.s32.totalorder %s23, 1
      %p204 = por %p202, %p203
      %p206 = scmp.ne.s32.totalorder %s189, %s205
      %p207 = scmp.eq.s32.totalorder %s23, 0
      %p208 = por %p206, %p207
      %s209 = ssub.s32 %s25, %s32
      %p210 = scmp.eq.s32.totalorder %s209, 0
      %s212 = sadd.s32 %s211, 1
      %s213 = scalar_select %p210, %s211, %s212
      %p216 = pneg %p210
      %p217 = scmp.eq.s32.totalorder %s17, 1
      %p218 = por %p216, %p217
      %p219 = scmp.ne.s32.totalorder %s211, %s214
      %p220 = scmp.eq.s32.totalorder %s17, 0
      %p221 = por %p219, %p220
      %p222 = scmp.ne.s32.totalorder %s211, %s214
      %p223 = scmp.eq.s32.totalorder %s22, 1
      %p224 = por %p222, %p223
      %p225 = scmp.ne.s32.totalorder %s214, %s215
      %p226 = scmp.eq.s32.totalorder %s22, 0
      %p227 = por %p225, %p226
      %p228 = scmp.ne.s32.totalorder %s214, %s215
      %p229 = scmp.eq.s32.totalorder %s23, 1
      %p230 = por %p228, %p229
      %p232 = scmp.ne.s32.totalorder %s215, %s231
      %p233 = scmp.eq.s32.totalorder %s23, 0
      %p234 = por %p232, %p233
      %s235 = ssub.s32 %s25, %s32
      %p236 = scmp.eq.s32.totalorder %s235, 0
      %s238 = sadd.s32 %s237, 1
      %s239 = scalar_select %p236, %s237, %s238
      %p242 = pneg %p236
      %p243 = scmp.eq.s32.totalorder %s17, 1
      %p244 = por %p242, %p243
      %p245 = scmp.ne.s32.totalorder %s237, %s240
      %p246 = scmp.eq.s32.totalorder %s17, 0
      %p247 = por %p245, %p246
      %p248 = scmp.ne.s32.totalorder %s237, %s240
      %p249 = scmp.eq.s32.totalorder %s22, 1
      %p250 = por %p248, %p249
      %p251 = scmp.ne.s32.totalorder %s240, %s241
      %p252 = scmp.eq.s32.totalorder %s22, 0
      %p253 = por %p251, %p252
      %p254 = scmp.ne.s32.totalorder %s240, %s241
      %p255 = scmp.eq.s32.totalorder %s23, 1
      %p256 = por %p254, %p255
      %p258 = scmp.ne.s32.totalorder %s241, %s257
      %p259 = scmp.eq.s32.totalorder %s23, 0
      %p260 = por %p258, %p259
      %s261 = ssub.s32 %s25, %s32
      %p262 = scmp.eq.s32.totalorder %s261, 0
      %s264 = sadd.s32 %s263, 1
      %s265 = scalar_select %p262, %s263, %s264
      %p268 = pneg %p262
      %p269 = scmp.eq.s32.totalorder %s17, 1
      %p270 = por %p268, %p269
      %p271 = scmp.ne.s32.totalorder %s263, %s266
      %p272 = scmp.eq.s32.totalorder %s17, 0
      %p273 = por %p271, %p272
      %p274 = scmp.ne.s32.totalorder %s263, %s266
      %p275 = scmp.eq.s32.totalorder %s22, 1
      %p276 = por %p274, %p275
      %p277 = scmp.ne.s32.totalorder %s266, %s267
      %p278 = scmp.eq.s32.totalorder %s22, 0
      %p279 = por %p277, %p278
      %p280 = scmp.ne.s32.totalorder %s266, %s267
      %p281 = scmp.eq.s32.totalorder %s23, 1
      %p282 = por %p280, %p281
      %p284 = scmp.ne.s32.totalorder %s267, %s283
      %p285 = scmp.eq.s32.totalorder %s23, 0
      %p286 = por %p284, %p285
      %s287 = ssub.s32 %s24, %s36
      %p288 = scmp.eq.s32.totalorder %s287, 0
      %s290 = sadd.s32 %s289, 1
      %s291 = scalar_select %p288, %s289, %s290
      %p294 = pneg %p288
      %p295 = scmp.eq.s32.totalorder %s17, 1
      %p296 = por %p294, %p295
      %p297 = scmp.ne.s32.totalorder %s289, %s292
      %p298 = scmp.eq.s32.totalorder %s17, 0
      %p299 = por %p297, %p298
      %p300 = scmp.ne.s32.totalorder %s289, %s292
      %p301 = scmp.eq.s32.totalorder %s22, 1
      %p302 = por %p300, %p301
      %p303 = scmp.ne.s32.totalorder %s292, %s293
      %p304 = scmp.eq.s32.totalorder %s22, 0
      %p305 = por %p303, %p304
      %p306 = scmp.ne.s32.totalorder %s292, %s293
      %p307 = scmp.eq.s32.totalorder %s23, 1
      %p308 = por %p306, %p307
      %p310 = scmp.ne.s32.totalorder %s293, %s309
      %p311 = scmp.eq.s32.totalorder %s23, 0
      %p312 = por %p310, %p311
      %p313 = scmp.le.s32.totalorder 1, %s17
      %p314 = scmp.lt.s32.totalorder %s17, 3
      %p315 = pnand %p313, %p314
      %p316 = pneg %p315
      // Predicated region
      $region9: #{clip_text_forward.1} parent=5 // pred_check
        _
      $region10: #{clip_text_forward.1} parent=5 // pred_check_branch
        %318 = sbr.rel (%p315) target = $region12
      $region11: #{clip_text_forward.1} parent=5 // pred_region
        %s319 = ssub.s32 %s17, 1
        // Predicated region
        $region13: #{clip_text_forward.1} parent=11 // pred_check
          %p320 = pneg %p55
        $region14: #{clip_text_forward.1} parent=11 // pred_check_branch
          %322 = sbr.rel (%p320) target = $region16
        $region15: #{clip_text_forward.1} parent=11 // pred_region
          %s323 = smul.u32 2, %s26
          %p324 = scmp.lt.s32.totalorder %s323, 1
          %s325 = scalar_select %p324, %s323, 1
          %s326 = smul.addr %s325, 8
          %s327 = scalar_lea.vmem %s0, %s326
          %s328 = smul.u32 2, %s26
        $region16: #{clip_text_forward.1} parent=11 // pred_fallthru
          _
        // Predicated region
        $region17: #{clip_text_forward.1} parent=11 // pred_check
          %p329 = pneg %p76
        $region18: #{clip_text_forward.1} parent=11 // pred_check_branch
          %331 = sbr.rel (%p329) target = $region20
        $region19: #{clip_text_forward.1} parent=11 // pred_region
          _
        $region20: #{clip_text_forward.1} parent=11 // pred_fallthru
          _
        // Predicated region
        $region21: #{clip_text_forward.1} parent=11 // pred_check
          %p332 = pneg %p97
        $region22: #{clip_text_forward.1} parent=11 // pred_check_branch
          %334 = sbr.rel (%p332) target = $region24
        $region23: #{clip_text_forward.1} parent=11 // pred_region
          _
        $region24: #{clip_text_forward.1} parent=11 // pred_fallthru
          _
      $region12: #{clip_text_forward.1} parent=5 // pred_fallthru
        _
      %p335 = scmp.lt.s32.totalorder %s17, 2
      // Predicated region
      $region25: #{clip_text_forward.1} parent=5 // pred_check
        %p336 = pneg %p335
      $region26: #{clip_text_forward.1} parent=5 // pred_check_branch
        %338 = sbr.rel (%p336) target = $region28
      $region27: #{clip_text_forward.1} parent=5 // pred_region
        // Predicated region
        $region29: #{clip_text_forward.1} parent=27 // pred_check
          %p339 = pneg %p117
        $region30: #{clip_text_forward.1} parent=27 // pred_check_branch
          %341 = sbr.rel (%p339) target = $region32
        $region31: #{clip_text_forward.1} parent=27 // pred_region
          %p342 = scmp.lt.s32.totalorder %s25, 1
          %s343 = scalar_select %p342, %s25, 1
          %s344 = smul.addr %s343, 48
          %s345 = smul.addr %s344, 4
          %s346 = scalar_lea.vmem %s3, %s345
        $region32: #{clip_text_forward.1} parent=27 // pred_fallthru
          _
        // Predicated region
        $region33: #{clip_text_forward.1} parent=27 // pred_check
          %p347 = pneg %p143
        $region34: #{clip_text_forward.1} parent=27 // pred_check_branch
          %349 = sbr.rel (%p347) target = $region36
        $region35: #{clip_text_forward.1} parent=27 // pred_region
          %p350 = scmp.lt.s32.totalorder %s25, 1
          %s351 = scalar_select %p350, %s25, 1
          %s352 = smul.addr %s351, 12
          %s353 = scalar_lea.vmem %s4, %s352
        $region36: #{clip_text_forward.1} parent=27 // pred_fallthru
          _
        // Predicated region
        $region37: #{clip_text_forward.1} parent=27 // pred_check
          %p354 = pneg %p169
        $region38: #{clip_text_forward.1} parent=27 // pred_check_branch
          %356 = sbr.rel (%p354) target = $region40
        $region39: #{clip_text_forward.1} parent=27 // pred_region
          %p357 = scmp.lt.s32.totalorder %s25, 1
          %s358 = scalar_select %p357, %s25, 1
          %s359 = smul.addr %s358, 4
          %s360 = smul.addr %s359, 4
          %s361 = scalar_lea.vmem %s5, %s360
        $region40: #{clip_text_forward.1} parent=27 // pred_fallthru
          _
        // Predicated region
        $region41: #{clip_text_forward.1} parent=27 // pred_check
          %p362 = pneg %p195
        $region42: #{clip_text_forward.1} parent=27 // pred_check_branch
          %364 = sbr.rel (%p362) target = $region44
        $region43: #{clip_text_forward.1} parent=27 // pred_region
          %p365 = scmp.lt.s32.totalorder %s25, 1
          %s366 = scalar_select %p365, %s25, 1
          %s367 = smul.addr %s366, 8
          %s368 = scalar_lea.vmem %s6, %s367
        $region44: #{clip_text_forward.1} parent=27 // pred_fallthru
          _
        // Predicated region
        $region45: #{clip_text_forward.1} parent=27 // pred_check
          %p369 = pneg %p221
        $region46: #{clip_text_forward.1} parent=27 // pred_check_branch
          %371 = sbr.rel (%p369) target = $region48
        $region47: #{clip_text_forward.1} parent=27 // pred_region
          %p372 = scmp.lt.s32.totalorder %s25, 1
          %s373 = scalar_select %p372, %s25, 1
          %s374 = smul.addr %s373, 4
          %s375 = smul.addr %s374, 4
          %s376 = scalar_lea.vmem %s7, %s375
        $region48: #{clip_text_forward.1} parent=27 // pred_fallthru
          _
        // Predicated region
        $region49: #{clip_text_forward.1} parent=27 // pred_check
          %p377 = pneg %p247
        $region50: #{clip_text_forward.1} parent=27 // pred_check_branch
          %379 = sbr.rel (%p377) target = $region52
        $region51: #{clip_text_forward.1} parent=27 // pred_region
          %p380 = scmp.lt.s32.totalorder %s25, 1
          %s381 = scalar_select %p380, %s25, 1
          %s382 = scalar_lea.vmem %s8, %s381
        $region52: #{clip_text_forward.1} parent=27 // pred_fallthru
          _
        // Predicated region
        $region53: #{clip_text_forward.1} parent=27 // pred_check
          %p383 = pneg %p273
        $region54: #{clip_text_forward.1} parent=27 // pred_check_branch
          %385 = sbr.rel (%p383) target = $region56
        $region55: #{clip_text_forward.1} parent=27 // pred_region
          %p386 = scmp.lt.s32.totalorder %s25, 1
          %s387 = scalar_select %p386, %s25, 1
          %s388 = smul.addr %s387, 16
          %s389 = smul.addr %s388, 4
          %s390 = scalar_lea.vmem %s9, %s389
        $region56: #{clip_text_forward.1} parent=27 // pred_fallthru
          _
      $region28: #{clip_text_forward.1} parent=5 // pred_fallthru
        _
      %p391 = scmp.le.s32.totalorder 1, %s17
      %p392 = scmp.lt.s32.totalorder %s17, 3
      %p393 = pnand %p391, %p392
      %p394 = pneg %p393
      // Predicated region
      $region57: #{clip_text_forward.1} parent=5 // pred_check
        _
      $region58: #{clip_text_forward.1} parent=5 // pred_check_branch
        %396 = sbr.rel (%p393) target = $region60
      $region59: #{clip_text_forward.1} parent=5 // pred_region
        %s397 = ssub.s32 %s17, 1
        %s398 = smul.u32 2, %s26
        %p399 = scmp.lt.s32.totalorder %s398, 1
        %s400 = scalar_select %p399, %s398, 1
        %s401 = smul.addr %s400, 8
        %s402 = scalar_lea.vmem %s0, %s401
        %p403 = pneg %p55
        %p404 = pneg %p52
        %p405 = pneg %p76
        %p406 = pneg %p73
        %p407 = pneg %p97
        %p408 = pneg %p94
        %p409 = scmp.lt.s32.totalorder %s27, 1
        %s410 = scalar_select %p409, %s27, 1
        %s411 = smul.addr %s410, 48
        %s412 = smul.addr %s411, 4
        %s413 = scalar_lea.vmem %s3, %s412
        %p414 = pneg %p123
        %p415 = pneg %p120
        %p416 = scmp.lt.s32.totalorder %s27, 1
        %s417 = scalar_select %p416, %s27, 1
        %s418 = smul.addr %s417, 12
        %s419 = scalar_lea.vmem %s4, %s418
        %p420 = pneg %p149
        %p421 = pneg %p146
        %p422 = scmp.lt.s32.totalorder %s27, 1
        %s423 = scalar_select %p422, %s27, 1
        %s424 = smul.addr %s423, 4
        %s425 = smul.addr %s424, 4
        %s426 = scalar_lea.vmem %s5, %s425
        %p427 = pneg %p175
        %p428 = pneg %p172
        %p429 = scmp.lt.s32.totalorder %s27, 1
        %s430 = scalar_select %p429, %s27, 1
        %s431 = smul.addr %s430, 8
        %s432 = scalar_lea.vmem %s6, %s431
        %p433 = pneg %p201
        %p434 = pneg %p198
        %p435 = scmp.lt.s32.totalorder %s27, 1
        %s436 = scalar_select %p435, %s27, 1
        %s437 = smul.addr %s436, 4
        %s438 = smul.addr %s437, 4
        %s439 = scalar_lea.vmem %s7, %s438
        %p440 = pneg %p227
        %p441 = pneg %p224
        %p442 = scmp.lt.s32.totalorder %s27, 1
        %s443 = scalar_select %p442, %s27, 1
        %s444 = scalar_lea.vmem %s8, %s443
        %p445 = pneg %p253
        %p446 = pneg %p250
        %p447 = scmp.lt.s32.totalorder %s27, 1
        %s448 = scalar_select %p447, %s27, 1
        %s449 = smul.addr %s448, 16
        %s450 = smul.addr %s449, 4
        %s451 = scalar_lea.vmem %s9, %s450
        %p452 = pneg %p279
        %p453 = pneg %p276
        %p454 = pneg %p305
        %p455 = pneg %p302
        %s456 = smul.u32 2, %s26
        %p457 = scmp.lt.s32.totalorder %s456, 1
        %s458 = scalar_select %p457, %s456, 1
        %s459 = smul.addr %s458, 8
        %s460 = scalar_lea.vmem %s0, %s459
        %s461 = smul.u32 2, %s26
        %p462 = scmp.lt.s32.totalorder %s27, 1
        %s463 = scalar_select %p462, %s27, 1
        %s464 = smul.addr %s463, 48
        %s465 = smul.addr %s464, 4
        %s466 = scalar_lea.vmem %s3, %s465
        %p467 = scmp.lt.s32.totalorder %s27, 1
        %s468 = scalar_select %p467, %s27, 1
        %s469 = smul.addr %s468, 12
        %s470 = scalar_lea.vmem %s4, %s469
        %p471 = scmp.lt.s32.totalorder %s27, 1
        %s472 = scalar_select %p471, %s27, 1
        %s473 = smul.addr %s472, 4
        %s474 = smul.addr %s473, 4
        %s475 = scalar_lea.vmem %s5, %s474
        %p476 = scmp.lt.s32.totalorder %s27, 1
        %s477 = scalar_select %p476, %s27, 1
        %s478 = smul.addr %s477, 8
        %s479 = scalar_lea.vmem %s6, %s478
        %p480 = scmp.lt.s32.totalorder %s27, 1
        %s481 = scalar_select %p480, %s27, 1
        %s482 = smul.addr %s481, 4
        %s483 = smul.addr %s482, 4
        %s484 = scalar_lea.vmem %s7, %s483
        %p485 = scmp.lt.s32.totalorder %s27, 1
        %s486 = scalar_select %p485, %s27, 1
        %s487 = scalar_lea.vmem %s8, %s486
        %p488 = scmp.lt.s32.totalorder %s27, 1
        %s489 = scalar_select %p488, %s27, 1
        %s490 = smul.addr %s489, 16
        %s491 = smul.addr %s490, 4
        %s492 = scalar_lea.vmem %s9, %s491
        %s493 = smul.u32 2, %s26
        %p495 = scmp.eq.s32.totalorder %s27, 0
        // Predicated region
        $region61: #{clip_text_forward.1} parent=59 // pred_check
          %p496 = pneg %p495
        $region62: #{clip_text_forward.1} parent=59 // pred_check_branch
          %498 = sbr.rel (%p496) target = $region64
        $region63: #{clip_text_forward.1} parent=59 // pred_region
          %v499 = vld [vmem:[%s460] sm:$0xff]
          %v500 = vld [vmem:[%s460 + $0x8] sm:$0xff]
          %v501 = vld [vmem:[%s1] sm:$0xff]
          %v502 = vadd.f32 %v499, %v501
          %v503 = vadd.f32 %v500, %v501
          %vm504 = vcmask 261120
          %505 = vst.msk [vmem:[#allocation2] sm:$0xff] %vm504, %v502
          %506 = vst.msk [vmem:[#allocation2 + $0x8] sm:$0xff] %vm504, %v503
        $region64: #{clip_text_forward.1} parent=59 // pred_fallthru
          _
        %v507 = vld [vmem:[#allocation2] sm:$0xff]
        %v508 = vld [vmem:[#allocation2 + $0x8] sm:$0xff]
        %v509 = vld [vmem:[%s479] sm:$0x3f]
        %vm510 = vcmask 261120
        %v511 = vsel %vm510, %v507, 0.0
        %512 = vadd.xlane.f32.xlu0 %v511
        %v513 = vpop.xlane.xlu0 %512
        %v514 = vsel %vm510, %v508, 0.0
        %515 = vadd.xlane.f32.xlu0 %v514
        %v516 = vpop.xlane.xlu0 %515
        %v517 = vrcp.pop 32.0
        %v518 = vmul.f32 32.0, %v517
        %v519 = vsub.f32 1.0, %v518
        %v520 = vmul.f32 %v517, %v519
        %v521 = vadd.f32 %v517, %v520
        %vm522 = vweird.f32 %v517
        %v523 = vsel %vm522, %v517, %v521
        %v524 = vmul.f32 %v513, %v523
        %v525 = vmul.f32 %v516, %v523
        %v526 = vsub.f32 %v507, %v524
        %v527 = vsub.f32 %v508, %v525
        %v528 = vmul.f32 %v526, %v526
        %v529 = vmul.f32 %v527, %v527
        %v530 = vsel %vm510, %v528, 0.0
        %531 = vadd.xlane.f32.xlu0 %v530
        %v532 = vpop.xlane.xlu0 %531
        %v533 = vsel %vm510, %v529, 0.0
        %534 = vadd.xlane.f32.xlu0 %v533
        %v535 = vpop.xlane.xlu0 %534
        %v536 = vmul.f32 %v532, %v523
        %v537 = vmul.f32 %v535, %v523
        %v538 = vadd.f32 %v536, 1e-05
        %v539 = vadd.f32 %v537, 1e-05
        %v540 = vrsqrt.pop %v538
        %v541 = vmul.f32 %v540, %v538
        %v542 = vmul.f32 %v541, %v540
        %v543 = vmul.f32 0.5, %v542
        %v544 = vsub.f32 1.5, %v543
        %v545 = vmul.f32 %v540, %v544
        %vm546 = vweird.f32 %v538
        %vm547 = vweird.f32 %v540
        %vm548 = vmor %vm546, %vm547
        %v549 = vsel %vm548, %v540, %v545
        %v550 = vrsqrt.pop %v539
        %v551 = vmul.f32 %v550, %v539
        %v552 = vmul.f32 %v551, %v550
        %v553 = vmul.f32 0.5, %v552
        %v554 = vsub.f32 1.5, %v553
        %v555 = vmul.f32 %v550, %v554
        %vm556 = vweird.f32 %v539
        %vm557 = vweird.f32 %v550
        %vm558 = vmor %vm556, %vm557
        %v559 = vsel %vm558, %v550, %v555
        %v560 = vmul.f32 %v526, %v549
        %v561 = vmul.f32 %v527, %v559
        %v562 = vperm.slane %v509, 0
        %v563 = vmul.f32 %v560, %v562
        %v564 = vmul.f32 %v561, %v562
        %v565 = vperm.slane %v509, 1
        %v566 = vadd.f32 %v563, %v565
        %v567 = vadd.f32 %v564, %v565
        %v568 = vpack.c.bf16 %v566, %v566
        %v569 = vpack.c.bf16 %v567, %v567
        %v570 = vld [vmem:[%s466] sm:$0xf]
        %v571 = vld [vmem:[%s466 + $0x4] sm:$0xf]
        %v572 = vld [vmem:[%s466 + $0x8] sm:$0xf]
        %v573 = vld [vmem:[%s466 + $0xc] sm:$0xf]
        %v574 = vld [vmem:[%s466 + $0x10] sm:$0xf]
        %v575 = vld [vmem:[%s466 + $0x14] sm:$0xf]
        %v576 = vld [vmem:[%s466 + $0x18] sm:$0xf]
        %v577 = vld [vmem:[%s466 + $0x1c] sm:$0xf]
        %v578 = vld [vmem:[%s466 + $0x20] sm:$0xf]
        %v579 = vld [vmem:[%s466 + $0x24] sm:$0xf]
        %v580 = vld [vmem:[%s466 + $0x28] sm:$0xf]
        %v581 = vld [vmem:[%s466 + $0x2c] sm:$0xf]
        %v582 = vld [vmem:[%s466 + $0x30] sm:$0xf]
        %v583 = vld [vmem:[%s466 + $0x34] sm:$0xf]
        %v584 = vld [vmem:[%s466 + $0x38] sm:$0xf]
        %v585 = vld [vmem:[%s466 + $0x3c] sm:$0xf]
        %v586 = vld [vmem:[%s466 + $0x40] sm:$0xf]
        %v587 = vld [vmem:[%s466 + $0x44] sm:$0xf]
        %v588 = vld [vmem:[%s466 + $0x48] sm:$0xf]
        %v589 = vld [vmem:[%s466 + $0x4c] sm:$0xf]
        %v590 = vld [vmem:[%s466 + $0x50] sm:$0xf]
        %v591 = vld [vmem:[%s466 + $0x54] sm:$0xf]
        %v592 = vld [vmem:[%s466 + $0x58] sm:$0xf]
        %v593 = vld [vmem:[%s466 + $0x5c] sm:$0xf]
        %v594 = vld [vmem:[%s466 + $0x60] sm:$0xf]
        %v595 = vld [vmem:[%s466 + $0x64] sm:$0xf]
        %v596 = vld [vmem:[%s466 + $0x68] sm:$0xf]
        %v597 = vld [vmem:[%s466 + $0x6c] sm:$0xf]
        %v598 = vld [vmem:[%s466 + $0x70] sm:$0xf]
        %v599 = vld [vmem:[%s466 + $0x74] sm:$0xf]
        %v600 = vld [vmem:[%s466 + $0x78] sm:$0xf]
        %v601 = vld [vmem:[%s466 + $0x7c] sm:$0xf]
        %v602 = vld [vmem:[%s466 + $0x80] sm:$0xf]
        %v603 = vld [vmem:[%s466 + $0x84] sm:$0xf]
        %v604 = vld [vmem:[%s466 + $0x88] sm:$0xf]
        %v605 = vld [vmem:[%s466 + $0x8c] sm:$0xf]
        %v606 = vld [vmem:[%s466 + $0x90] sm:$0xf]
        %v607 = vld [vmem:[%s466 + $0x94] sm:$0xf]
        %v608 = vld [vmem:[%s466 + $0x98] sm:$0xf]
        %v609 = vld [vmem:[%s466 + $0x9c] sm:$0xf]
        %v610 = vld [vmem:[%s466 + $0xa0] sm:$0xf]
        %v611 = vld [vmem:[%s466 + $0xa4] sm:$0xf]
        %v612 = vld [vmem:[%s466 + $0xa8] sm:$0xf]
        %v613 = vld [vmem:[%s466 + $0xac] sm:$0xf]
        %v614 = vld [vmem:[%s466 + $0xb0] sm:$0xf]
        %v615 = vld [vmem:[%s466 + $0xb4] sm:$0xf]
        %v616 = vld [vmem:[%s466 + $0xb8] sm:$0xf]
        %v617 = vld [vmem:[%s466 + $0xbc] sm:$0xf]
        %v618 = vld [vmem:[%s470] sm:$0x1]
        %v619 = vld [vmem:[%s470 + $0x1] sm:$0x1]
        %v620 = vld [vmem:[%s470 + $0x2] sm:$0x1]
        %v621 = vld [vmem:[%s470 + $0x3] sm:$0x1]
        %v622 = vld [vmem:[%s470 + $0x4] sm:$0x1]
        %v623 = vld [vmem:[%s470 + $0x5] sm:$0x1]
        %v624 = vld [vmem:[%s470 + $0x6] sm:$0x1]
        %v625 = vld [vmem:[%s470 + $0x7] sm:$0x1]
        %v626 = vld [vmem:[%s470 + $0x8] sm:$0x1]
        %v627 = vld [vmem:[%s470 + $0x9] sm:$0x1]
        %v628 = vld [vmem:[%s470 + $0xa] sm:$0x1]
        %v629 = vld [vmem:[%s470 + $0xb] sm:$0x1]
        %v630 = vld [vmem:[%s475] sm:$0xf]
        %v631 = vld [vmem:[%s475 + $0x4] sm:$0xf]
        %v632 = vld [vmem:[%s475 + $0x8] sm:$0xf]
        %v633 = vld [vmem:[%s475 + $0xc] sm:$0xf]
        %v634 = vlaneseq
        %v635 = vshrl.u32 %v634, 7
        %v636 = vlaneseq
        %v637 = vand.u32 %v636, 127
        %vm638 = vcmp.gt.s32.totalorder %v637, %v635
        %v639 = vsel %vm638, -1e+09, 0.0
        %v644 = vperm.slane %v618, 0
        %v645 = vperm.slane %v619, 0
        %v646 = vperm.slane %v620, 0
        %v647 = vperm.slane %v621, 0
        %v656 = vunpack.c.l.b16 %v570
        %v657 = vunpack.c.l.b16 %v571
        %v658 = vunpack.c.l.b16 %v572
        %v659 = vunpack.c.l.b16 %v573
        %v660 = vpack.c.b16 %v657, %v656
        %v661 = vpack.c.b16 %v659, %v658
        %v665 = vsel %vm510, %v568, 0
        %667 = vmatpush.bf16.msra.mxu0 0
        %668 = vmatpush.bf16.msra.mxu0 0
        %669 = vmatpush.bf16.msra.mxu0 0
        %670 = vmatpush.bf16.msra.mxu0 0
        %671 = vmatpush.bf16.msra.mxu0 0
        %672 = vmatpush.bf16.msra.mxu0 0
        %673 = vmatpush.bf16.msra.mxu0 %v661
        %674 = vmatpush.bf16.msra.mxu0 %v660
        %675 = vmatmul.bf16.gmra.mxu0 %v665
        %v676 = vpop.f32.mrf.mxu0
        %v677 = vadd.f32 %v644, %v676
        %v678 = vpop.f32.mrf.mxu0
        %679 = vdwg.mxu0
        %v684 = vunpack.c.l.b16 %v574
        %v685 = vunpack.c.l.b16 %v575
        %v686 = vunpack.c.l.b16 %v576
        %v687 = vunpack.c.l.b16 %v577
        %v688 = vpack.c.b16 %v685, %v684
        %v689 = vpack.c.b16 %v687, %v686
        %692 = vmatpush.bf16.msra.mxu0 0
        %693 = vmatpush.bf16.msra.mxu0 0
        %694 = vmatpush.bf16.msra.mxu0 0
        %695 = vmatpush.bf16.msra.mxu0 0
        %696 = vmatpush.bf16.msra.mxu0 0
        %697 = vmatpush.bf16.msra.mxu0 0
        %698 = vmatpush.bf16.msra.mxu0 %v689
        %699 = vmatpush.bf16.msra.mxu0 %v688
        %700 = vmatmul.bf16.gmra.mxu0 %v665
        %v701 = vpop.f32.mrf.mxu0
        %v702 = vadd.f32 %v645, %v701
        %v703 = vpop.f32.mrf.mxu0
        %704 = vdwg.mxu0
        %v709 = vunpack.c.l.b16 %v578
        %v710 = vunpack.c.l.b16 %v579
        %v711 = vunpack.c.l.b16 %v580
        %v712 = vunpack.c.l.b16 %v581
        %v713 = vpack.c.b16 %v710, %v709
        %v714 = vpack.c.b16 %v712, %v711
        %717 = vmatpush.bf16.msra.mxu0 0
        %718 = vmatpush.bf16.msra.mxu0 0
        %719 = vmatpush.bf16.msra.mxu0 0
        %720 = vmatpush.bf16.msra.mxu0 0
        %721 = vmatpush.bf16.msra.mxu0 0
        %722 = vmatpush.bf16.msra.mxu0 0
        %723 = vmatpush.bf16.msra.mxu0 %v714
        %724 = vmatpush.bf16.msra.mxu0 %v713
        %725 = vmatmul.bf16.gmra.mxu0 %v665
        %v726 = vpop.f32.mrf.mxu0
        %v727 = vadd.f32 %v646, %v726
        %v728 = vpop.f32.mrf.mxu0
        %729 = vdwg.mxu0
        %v734 = vunpack.c.l.b16 %v582
        %v735 = vunpack.c.l.b16 %v583
        %v736 = vunpack.c.l.b16 %v584
        %v737 = vunpack.c.l.b16 %v585
        %v738 = vpack.c.b16 %v735, %v734
        %v739 = vpack.c.b16 %v737, %v736
        %742 = vmatpush.bf16.msra.mxu0 0
        %743 = vmatpush.bf16.msra.mxu0 0
        %744 = vmatpush.bf16.msra.mxu0 0
        %745 = vmatpush.bf16.msra.mxu0 0
        %746 = vmatpush.bf16.msra.mxu0 0
        %747 = vmatpush.bf16.msra.mxu0 0
        %748 = vmatpush.bf16.msra.mxu0 %v739
        %749 = vmatpush.bf16.msra.mxu0 %v738
        %750 = vmatmul.bf16.gmra.mxu0 %v665
        %v751 = vpop.f32.mrf.mxu0
        %v752 = vadd.f32 %v647, %v751
        %v753 = vpop.f32.mrf.mxu0
        %754 = vdwg.mxu0
        %v759 = vperm.slane %v622, 0
        %v760 = vperm.slane %v623, 0
        %v761 = vperm.slane %v624, 0
        %v762 = vperm.slane %v625, 0
        %v771 = vunpack.c.l.b16 %v586
        %v772 = vunpack.c.l.b16 %v587
        %v773 = vunpack.c.l.b16 %v588
        %v774 = vunpack.c.l.b16 %v589
        %v775 = vpack.c.b16 %v772, %v771
        %v776 = vpack.c.b16 %v774, %v773
        %779 = vmatpush.bf16.msra.mxu0 0
        %780 = vmatpush.bf16.msra.mxu0 0
        %781 = vmatpush.bf16.msra.mxu0 0
        %782 = vmatpush.bf16.msra.mxu0 0
        %783 = vmatpush.bf16.msra.mxu0 0
        %784 = vmatpush.bf16.msra.mxu0 0
        %785 = vmatpush.bf16.msra.mxu0 %v776
        %786 = vmatpush.bf16.msra.mxu0 %v775
        %787 = vmatmul.bf16.gmra.mxu0 %v665
        %v788 = vpop.f32.mrf.mxu0
        %v789 = vadd.f32 %v759, %v788
        %v790 = vpop.f32.mrf.mxu0
        %791 = vdwg.mxu0
        %v796 = vunpack.c.l.b16 %v590
        %v797 = vunpack.c.l.b16 %v591
        %v798 = vunpack.c.l.b16 %v592
        %v799 = vunpack.c.l.b16 %v593
        %v800 = vpack.c.b16 %v797, %v796
        %v801 = vpack.c.b16 %v799, %v798
        %804 = vmatpush.bf16.msra.mxu0 0
        %805 = vmatpush.bf16.msra.mxu0 0
        %806 = vmatpush.bf16.msra.mxu0 0
        %807 = vmatpush.bf16.msra.mxu0 0
        %808 = vmatpush.bf16.msra.mxu0 0
        %809 = vmatpush.bf16.msra.mxu0 0
        %810 = vmatpush.bf16.msra.mxu0 %v801
        %811 = vmatpush.bf16.msra.mxu0 %v800
        %812 = vmatmul.bf16.gmra.mxu0 %v665
        %v813 = vpop.f32.mrf.mxu0
        %v814 = vadd.f32 %v760, %v813
        %v815 = vpop.f32.mrf.mxu0
        %816 = vdwg.mxu0
        %v821 = vunpack.c.l.b16 %v594
        %v822 = vunpack.c.l.b16 %v595
        %v823 = vunpack.c.l.b16 %v596
        %v824 = vunpack.c.l.b16 %v597
        %v825 = vpack.c.b16 %v822, %v821
        %v826 = vpack.c.b16 %v824, %v823
        %829 = vmatpush.bf16.msra.mxu0 0
        %830 = vmatpush.bf16.msra.mxu0 0
        %831 = vmatpush.bf16.msra.mxu0 0
        %832 = vmatpush.bf16.msra.mxu0 0
        %833 = vmatpush.bf16.msra.mxu0 0
        %834 = vmatpush.bf16.msra.mxu0 0
        %835 = vmatpush.bf16.msra.mxu0 %v826
        %836 = vmatpush.bf16.msra.mxu0 %v825
        %837 = vmatmul.bf16.gmra.mxu0 %v665
        %v838 = vpop.f32.mrf.mxu0
        %v839 = vadd.f32 %v761, %v838
        %v840 = vpop.f32.mrf.mxu0
        %841 = vdwg.mxu0
        %v846 = vunpack.c.l.b16 %v598
        %v847 = vunpack.c.l.b16 %v599
        %v848 = vunpack.c.l.b16 %v600
        %v849 = vunpack.c.l.b16 %v601
        %v850 = vpack.c.b16 %v847, %v846
        %v851 = vpack.c.b16 %v849, %v848
        %854 = vmatpush.bf16.msra.mxu0 0
        %855 = vmatpush.bf16.msra.mxu0 0
        %856 = vmatpush.bf16.msra.mxu0 0
        %857 = vmatpush.bf16.msra.mxu0 0
        %858 = vmatpush.bf16.msra.mxu0 0
        %859 = vmatpush.bf16.msra.mxu0 0
        %860 = vmatpush.bf16.msra.mxu0 %v851
        %861 = vmatpush.bf16.msra.mxu0 %v850
        %862 = vmatmul.bf16.gmra.mxu0 %v665
        %v863 = vpop.f32.mrf.mxu0
        %v864 = vadd.f32 %v762, %v863
        %v865 = vpop.f32.mrf.mxu0
        %866 = vdwg.mxu0
        %v871 = vperm.slane %v626, 0
        %v872 = vperm.slane %v627, 0
        %v873 = vperm.slane %v628, 0
        %v874 = vperm.slane %v629, 0
        %v883 = vunpack.c.l.b16 %v602
        %v884 = vunpack.c.l.b16 %v603
        %v885 = vunpack.c.l.b16 %v604
        %v886 = vunpack.c.l.b16 %v605
        %v887 = vpack.c.b16 %v884, %v883
        %v888 = vpack.c.b16 %v886, %v885
        %891 = vmatpush.bf16.msra.mxu0 0
        %892 = vmatpush.bf16.msra.mxu0 0
        %893 = vmatpush.bf16.msra.mxu0 0
        %894 = vmatpush.bf16.msra.mxu0 0
        %895 = vmatpush.bf16.msra.mxu0 0
        %896 = vmatpush.bf16.msra.mxu0 0
        %897 = vmatpush.bf16.msra.mxu0 %v888
        %898 = vmatpush.bf16.msra.mxu0 %v887
        %899 = vmatmul.bf16.gmra.mxu0 %v665
        %v900 = vpop.f32.mrf.mxu0
        %v901 = vadd.f32 %v871, %v900
        %v902 = vpop.f32.mrf.mxu0
        %903 = vdwg.mxu0
        %v908 = vunpack.c.l.b16 %v606
        %v909 = vunpack.c.l.b16 %v607
        %v910 = vunpack.c.l.b16 %v608
        %v911 = vunpack.c.l.b16 %v609
        %v912 = vpack.c.b16 %v909, %v908
        %v913 = vpack.c.b16 %v911, %v910
        %916 = vmatpush.bf16.msra.mxu0 0
        %917 = vmatpush.bf16.msra.mxu0 0
        %918 = vmatpush.bf16.msra.mxu0 0
        %919 = vmatpush.bf16.msra.mxu0 0
        %920 = vmatpush.bf16.msra.mxu0 0
        %921 = vmatpush.bf16.msra.mxu0 0
        %922 = vmatpush.bf16.msra.mxu0 %v913
        %923 = vmatpush.bf16.msra.mxu0 %v912
        %924 = vmatmul.bf16.gmra.mxu0 %v665
        %v925 = vpop.f32.mrf.mxu0
        %v926 = vadd.f32 %v872, %v925
        %v927 = vpop.f32.mrf.mxu0
        %928 = vdwg.mxu0
        %v933 = vunpack.c.l.b16 %v610
        %v934 = vunpack.c.l.b16 %v611
        %v935 = vunpack.c.l.b16 %v612
        %v936 = vunpack.c.l.b16 %v613
        %v937 = vpack.c.b16 %v934, %v933
        %v938 = vpack.c.b16 %v936, %v935
        %941 = vmatpush.bf16.msra.mxu0 0
        %942 = vmatpush.bf16.msra.mxu0 0
        %943 = vmatpush.bf16.msra.mxu0 0
        %944 = vmatpush.bf16.msra.mxu0 0
        %945 = vmatpush.bf16.msra.mxu0 0
        %946 = vmatpush.bf16.msra.mxu0 0
        %947 = vmatpush.bf16.msra.mxu0 %v938
        %948 = vmatpush.bf16.msra.mxu0 %v937
        %949 = vmatmul.bf16.gmra.mxu0 %v665
        %v950 = vpop.f32.mrf.mxu0
        %v951 = vadd.f32 %v873, %v950
        %v952 = vpop.f32.mrf.mxu0
        %953 = vdwg.mxu0
        %v958 = vunpack.c.l.b16 %v614
        %v959 = vunpack.c.l.b16 %v615
        %v960 = vunpack.c.l.b16 %v616
        %v961 = vunpack.c.l.b16 %v617
        %v962 = vpack.c.b16 %v959, %v958
        %v963 = vpack.c.b16 %v961, %v960
        %966 = vmatpush.bf16.msra.mxu0 0
        %967 = vmatpush.bf16.msra.mxu0 0
        %968 = vmatpush.bf16.msra.mxu0 0
        %969 = vmatpush.bf16.msra.mxu0 0
        %970 = vmatpush.bf16.msra.mxu0 0
        %971 = vmatpush.bf16.msra.mxu0 0
        %972 = vmatpush.bf16.msra.mxu0 %v963
        %973 = vmatpush.bf16.msra.mxu0 %v962
        %974 = vmatmul.bf16.gmra.mxu0 %v665
        %v975 = vpop.f32.mrf.mxu0
        %v976 = vadd.f32 %v874, %v975
        %v977 = vpop.f32.mrf.mxu0
        %978 = vdwg.mxu0
        %vm979 = vcmask 64512
        %v981 = vsel %vm979, %v677, 0
        %v984 = vsel %vm979, %v789, 0
        %986 = vmatpush.xpose.msra.mxu0 0.0
        %987 = vmatpush.xpose.msra.mxu0 0.0
        %988 = vmatpush.xpose.msra.mxu0 0.0
        %989 = vmatpush.xpose.msra.mxu0 0.0
        %990 = vmatpush.xpose.msra.mxu0 0.0
        %991 = vmatpush.xpose.msra.mxu0 0.0
        %992 = vmatpush.xpose.msra.mxu0 0.0
        %993 = vmatpush.xpose.msra.mxu0 0.0
        %994 = vmatpush.xpose.msra.mxu0 0.0
        %995 = vmatpush.xpose.msra.mxu0 0.0
        %996 = vmatpush.xpose.msra.mxu0 0.0
        %997 = vmatpush.xpose.msra.mxu0 0.0
        %998 = vmatpush.xpose.msra.mxu0 0.0
        %999 = vmatpush.xpose.msra.mxu0 0.0
        %1000 = vmatpush.xpose.msra.mxu0 0.0
        %1001 = vmatpush.xpose.msra.mxu0 %v984
        %1002 = vmatmul.f32.gmra.mxu0 %v981
        %v1003 = vpop.f32.mrf.mxu0
        %v1004 = vadd.f32 0.0, %v1003
        %1005 = vdwg.mxu0
        %v1007 = vsel %vm979, %v702, 0
        %v1010 = vsel %vm979, %v814, 0
        %1012 = vmatpush.xpose.msra.mxu0 0.0
        %1013 = vmatpush.xpose.msra.mxu0 0.0
        %1014 = vmatpush.xpose.msra.mxu0 0.0
        %1015 = vmatpush.xpose.msra.mxu0 0.0
        %1016 = vmatpush.xpose.msra.mxu0 0.0
        %1017 = vmatpush.xpose.msra.mxu0 0.0
        %1018 = vmatpush.xpose.msra.mxu0 0.0
        %1019 = vmatpush.xpose.msra.mxu0 0.0
        %1020 = vmatpush.xpose.msra.mxu0 0.0
        %1021 = vmatpush.xpose.msra.mxu0 0.0
        %1022 = vmatpush.xpose.msra.mxu0 0.0
        %1023 = vmatpush.xpose.msra.mxu0 0.0
        %1024 = vmatpush.xpose.msra.mxu0 0.0
        %1025 = vmatpush.xpose.msra.mxu0 0.0
        %1026 = vmatpush.xpose.msra.mxu0 0.0
        %1027 = vmatpush.xpose.msra.mxu0 %v1010
        %1028 = vmatmul.f32.gmra.mxu0 %v1007
        %v1029 = vpop.f32.mrf.mxu0
        %v1030 = vadd.f32 0.0, %v1029
        %1031 = vdwg.mxu0
        %v1033 = vsel %vm979, %v727, 0
        %v1036 = vsel %vm979, %v839, 0
        %1038 = vmatpush.xpose.msra.mxu0 0.0
        %1039 = vmatpush.xpose.msra.mxu0 0.0
        %1040 = vmatpush.xpose.msra.mxu0 0.0
        %1041 = vmatpush.xpose.msra.mxu0 0.0
        %1042 = vmatpush.xpose.msra.mxu0 0.0
        %1043 = vmatpush.xpose.msra.mxu0 0.0
        %1044 = vmatpush.xpose.msra.mxu0 0.0
        %1045 = vmatpush.xpose.msra.mxu0 0.0
        %1046 = vmatpush.xpose.msra.mxu0 0.0
        %1047 = vmatpush.xpose.msra.mxu0 0.0
        %1048 = vmatpush.xpose.msra.mxu0 0.0
        %1049 = vmatpush.xpose.msra.mxu0 0.0
        %1050 = vmatpush.xpose.msra.mxu0 0.0
        %1051 = vmatpush.xpose.msra.mxu0 0.0
        %1052 = vmatpush.xpose.msra.mxu0 0.0
        %1053 = vmatpush.xpose.msra.mxu0 %v1036
        %1054 = vmatmul.f32.gmra.mxu0 %v1033
        %v1055 = vpop.f32.mrf.mxu0
        %v1056 = vadd.f32 0.0, %v1055
        %1057 = vdwg.mxu0
        %v1059 = vsel %vm979, %v752, 0
        %v1062 = vsel %vm979, %v864, 0
        %1064 = vmatpush.xpose.msra.mxu0 0.0
        %1065 = vmatpush.xpose.msra.mxu0 0.0
        %1066 = vmatpush.xpose.msra.mxu0 0.0
        %1067 = vmatpush.xpose.msra.mxu0 0.0
        %1068 = vmatpush.xpose.msra.mxu0 0.0
        %1069 = vmatpush.xpose.msra.mxu0 0.0
        %1070 = vmatpush.xpose.msra.mxu0 0.0
        %1071 = vmatpush.xpose.msra.mxu0 0.0
        %1072 = vmatpush.xpose.msra.mxu0 0.0
        %1073 = vmatpush.xpose.msra.mxu0 0.0
        %1074 = vmatpush.xpose.msra.mxu0 0.0
        %1075 = vmatpush.xpose.msra.mxu0 0.0
        %1076 = vmatpush.xpose.msra.mxu0 0.0
        %1077 = vmatpush.xpose.msra.mxu0 0.0
        %1078 = vmatpush.xpose.msra.mxu0 0.0
        %1079 = vmatpush.xpose.msra.mxu0 %v1062
        %1080 = vmatmul.f32.gmra.mxu0 %v1059
        %v1081 = vpop.f32.mrf.mxu0
        %v1082 = vadd.f32 0.0, %v1081
        %1083 = vdwg.mxu0
        %v1084 = vmul.f32 %v1004, 0.35355338
        %v1085 = vmul.f32 %v1030, 0.35355338
        %v1086 = vmul.f32 %v1056, 0.35355338
        %v1087 = vmul.f32 %v1082, 0.35355338
        %v1088 = vadd.f32 %v1084, %v639
        %v1089 = vadd.f32 %v1085, %v639
        %v1090 = vadd.f32 %v1086, %v639
        %v1091 = vadd.f32 %v1087, %v639
        %v1092 = vsel %vm979, %v1088, -inf
        %1093 = vmax.xlane.f32.xlu0 %v1092
        %v1094 = vpop.xlane.xlu0 %1093
        %v1095 = vsel %vm979, %v1089, -inf
        %1096 = vmax.xlane.f32.xlu0 %v1095
        %v1097 = vpop.xlane.xlu0 %1096
        %v1098 = vsel %vm979, %v1090, -inf
        %1099 = vmax.xlane.f32.xlu0 %v1098
        %v1100 = vpop.xlane.xlu0 %1099
        %v1101 = vsel %vm979, %v1091, -inf
        %1102 = vmax.xlane.f32.xlu0 %v1101
        %v1103 = vpop.xlane.xlu0 %1102
        %v1104 = vsub.f32 %v1088, %v1094
        %v1105 = vsub.f32 %v1089, %v1097
        %v1106 = vsub.f32 %v1090, %v1100
        %v1107 = vsub.f32 %v1091, %v1103
        %v1108 = vmul.f32 %v1104, 1.442695
        %v1109 = vpow.pop %v1108
        %v1110 = vmul.f32 %v1105, 1.442695
        %v1111 = vpow.pop %v1110
        %v1112 = vmul.f32 %v1106, 1.442695
        %v1113 = vpow.pop %v1112
        %v1114 = vmul.f32 %v1107, 1.442695
        %v1115 = vpow.pop %v1114
        %v1116 = vsel %vm979, %v1109, 0.0
        %1117 = vadd.xlane.f32.xlu0 %v1116
        %v1118 = vpop.xlane.xlu0 %1117
        %v1119 = vsel %vm979, %v1111, 0.0
        %1120 = vadd.xlane.f32.xlu0 %v1119
        %v1121 = vpop.xlane.xlu0 %1120
        %v1122 = vsel %vm979, %v1113, 0.0
        %1123 = vadd.xlane.f32.xlu0 %v1122
        %v1124 = vpop.xlane.xlu0 %1123
        %v1125 = vsel %vm979, %v1115, 0.0
        %1126 = vadd.xlane.f32.xlu0 %v1125
        %v1127 = vpop.xlane.xlu0 %1126
        %v1128 = vrcp.pop %v1118
        %v1129 = vrcp.pop %v1121
        %v1130 = vrcp.pop %v1124
        %v1131 = vrcp.pop %v1127
        %v1132 = vmul.f32 %v1109, %v1128
        %v1133 = vmul.f32 %v1111, %v1129
        %v1134 = vmul.f32 %v1113, %v1130
        %v1135 = vmul.f32 %v1115, %v1131
        %v1137 = vsel %vm979, %v1132, 0
        %1139 = vmatpush.msra.mxu0 0.0
        %1140 = vmatpush.msra.mxu0 0.0
        %1141 = vmatpush.msra.mxu0 0.0
        %1142 = vmatpush.msra.mxu0 0.0
        %1143 = vmatpush.msra.mxu0 0.0
        %1144 = vmatpush.msra.mxu0 0.0
        %1145 = vmatpush.msra.mxu0 0.0
        %1146 = vmatpush.msra.mxu0 0.0
        %1147 = vmatpush.msra.mxu0 0.0
        %1148 = vmatpush.msra.mxu0 0.0
        %1149 = vmatpush.msra.mxu0 0.0
        %1150 = vmatpush.msra.mxu0 0.0
        %1151 = vmatpush.msra.mxu0 0.0
        %1152 = vmatpush.msra.mxu0 0.0
        %1153 = vmatpush.msra.mxu0 0.0
        %1154 = vmatpush.msra.mxu0 %v901
        %1155 = vmatmul.f32.gmra.mxu0 %v1137
        %v1156 = vpop.f32.mrf.mxu0
        %v1157 = vadd.f32 0.0, %v1156
        %1158 = vdwg.mxu0
        %v1160 = vsel %vm979, %v1133, 0
        %1162 = vmatpush.msra.mxu0 0.0
        %1163 = vmatpush.msra.mxu0 0.0
        %1164 = vmatpush.msra.mxu0 0.0
        %1165 = vmatpush.msra.mxu0 0.0
        %1166 = vmatpush.msra.mxu0 0.0
        %1167 = vmatpush.msra.mxu0 0.0
        %1168 = vmatpush.msra.mxu0 0.0
        %1169 = vmatpush.msra.mxu0 0.0
        %1170 = vmatpush.msra.mxu0 0.0
        %1171 = vmatpush.msra.mxu0 0.0
        %1172 = vmatpush.msra.mxu0 0.0
        %1173 = vmatpush.msra.mxu0 0.0
        %1174 = vmatpush.msra.mxu0 0.0
        %1175 = vmatpush.msra.mxu0 0.0
        %1176 = vmatpush.msra.mxu0 0.0
        %1177 = vmatpush.msra.mxu0 %v926
        %1178 = vmatmul.f32.gmra.mxu0 %v1160
        %v1179 = vpop.f32.mrf.mxu0
        %v1180 = vadd.f32 0.0, %v1179
        %1181 = vdwg.mxu0
        %v1183 = vsel %vm979, %v1134, 0
        %1185 = vmatpush.msra.mxu0 0.0
        %1186 = vmatpush.msra.mxu0 0.0
        %1187 = vmatpush.msra.mxu0 0.0
        %1188 = vmatpush.msra.mxu0 0.0
        %1189 = vmatpush.msra.mxu0 0.0
        %1190 = vmatpush.msra.mxu0 0.0
        %1191 = vmatpush.msra.mxu0 0.0
        %1192 = vmatpush.msra.mxu0 0.0
        %1193 = vmatpush.msra.mxu0 0.0
        %1194 = vmatpush.msra.mxu0 0.0
        %1195 = vmatpush.msra.mxu0 0.0
        %1196 = vmatpush.msra.mxu0 0.0
        %1197 = vmatpush.msra.mxu0 0.0
        %1198 = vmatpush.msra.mxu0 0.0
        %1199 = vmatpush.msra.mxu0 0.0
        %1200 = vmatpush.msra.mxu0 %v951
        %1201 = vmatmul.f32.gmra.mxu0 %v1183
        %v1202 = vpop.f32.mrf.mxu0
        %v1203 = vadd.f32 0.0, %v1202
        %1204 = vdwg.mxu0
        %v1206 = vsel %vm979, %v1135, 0
        %1208 = vmatpush.msra.mxu0 0.0
        %1209 = vmatpush.msra.mxu0 0.0
        %1210 = vmatpush.msra.mxu0 0.0
        %1211 = vmatpush.msra.mxu0 0.0
        %1212 = vmatpush.msra.mxu0 0.0
        %1213 = vmatpush.msra.mxu0 0.0
        %1214 = vmatpush.msra.mxu0 0.0
        %1215 = vmatpush.msra.mxu0 0.0
        %1216 = vmatpush.msra.mxu0 0.0
        %1217 = vmatpush.msra.mxu0 0.0
        %1218 = vmatpush.msra.mxu0 0.0
        %1219 = vmatpush.msra.mxu0 0.0
        %1220 = vmatpush.msra.mxu0 0.0
        %1221 = vmatpush.msra.mxu0 0.0
        %1222 = vmatpush.msra.mxu0 0.0
        %1223 = vmatpush.msra.mxu0 %v976
        %1224 = vmatmul.f32.gmra.mxu0 %v1206
        %v1225 = vpop.f32.mrf.mxu0
        %v1226 = vadd.f32 0.0, %v1225
        %1227 = vdwg.mxu0
        %v1228 = vpack.c.bf16 %v1157, %v1157
        %v1229 = vpack.c.bf16 %v1180, %v1180
        %v1230 = vpack.c.bf16 %v1203, %v1203
        %v1231 = vpack.c.bf16 %v1226, %v1226
        %v1233 = vsel %vm979, %v1228, 0
        %vm1235 = vcmask 1043456
        %v1237 = vsel %vm1235, %v630, 0
        %1239 = vmatpush.bf16.msra.mxu0 0
        %1240 = vmatpush.bf16.msra.mxu0 0
        %1241 = vmatpush.bf16.msra.mxu0 0
        %1242 = vmatpush.bf16.msra.mxu0 0
        %1243 = vmatpush.bf16.msra.mxu0 0
        %1244 = vmatpush.bf16.msra.mxu0 0
        %1245 = vmatpush.bf16.msra.mxu0 0
        %1246 = vmatpush.bf16.msra.mxu0 %v1237
        %1247 = vmatmul.bf16.gmra.mxu0 %v1233
        %v1248 = vpop.f32.mrf.mxu0
        %v1249 = vadd.f32 0.0, %v1248
        %v1250 = vpop.f32.mrf.mxu0
        %1251 = vdwg.mxu0
        %v1253 = vsel %vm979, %v1229, 0
        %v1256 = vsel %vm1235, %v631, 0
        %1258 = vmatpush.bf16.msra.mxu0 0
        %1259 = vmatpush.bf16.msra.mxu0 0
        %1260 = vmatpush.bf16.msra.mxu0 0
        %1261 = vmatpush.bf16.msra.mxu0 0
        %1262 = vmatpush.bf16.msra.mxu0 0
        %1263 = vmatpush.bf16.msra.mxu0 0
        %1264 = vmatpush.bf16.msra.mxu0 0
        %1265 = vmatpush.bf16.msra.mxu0 %v1256
        %1266 = vmatmul.bf16.gmra.mxu0 %v1253
        %v1267 = vpop.f32.mrf.mxu0
        %v1268 = vadd.f32 0.0, %v1267
        %v1269 = vpop.f32.mrf.mxu0
        %1270 = vdwg.mxu0
        %v1272 = vsel %vm979, %v1230, 0
        %v1275 = vsel %vm1235, %v632, 0
        %1277 = vmatpush.bf16.msra.mxu0 0
        %1278 = vmatpush.bf16.msra.mxu0 0
        %1279 = vmatpush.bf16.msra.mxu0 0
        %1280 = vmatpush.bf16.msra.mxu0 0
        %1281 = vmatpush.bf16.msra.mxu0 0
        %1282 = vmatpush.bf16.msra.mxu0 0
        %1283 = vmatpush.bf16.msra.mxu0 0
        %1284 = vmatpush.bf16.msra.mxu0 %v1275
        %1285 = vmatmul.bf16.gmra.mxu0 %v1272
        %v1286 = vpop.f32.mrf.mxu0
        %v1287 = vadd.f32 0.0, %v1286
        %v1288 = vpop.f32.mrf.mxu0
        %1289 = vdwg.mxu0
        %v1291 = vsel %vm979, %v1231, 0
        %v1294 = vsel %vm1235, %v633, 0
        %1296 = vmatpush.bf16.msra.mxu0 0
        %1297 = vmatpush.bf16.msra.mxu0 0
        %1298 = vmatpush.bf16.msra.mxu0 0
        %1299 = vmatpush.bf16.msra.mxu0 0
        %1300 = vmatpush.bf16.msra.mxu0 0
        %1301 = vmatpush.bf16.msra.mxu0 0
        %1302 = vmatpush.bf16.msra.mxu0 0
        %1303 = vmatpush.bf16.msra.mxu0 %v1294
        %1304 = vmatmul.bf16.gmra.mxu0 %v1291
        %v1305 = vpop.f32.mrf.mxu0
        %v1306 = vadd.f32 0.0, %v1305
        %v1307 = vpop.f32.mrf.mxu0
        %1308 = vdwg.mxu0
        %v1309 = vsel %vm510, %v1249, 0.0
        %v1310 = vsel %vm510, %v1268, 0.0
        %v1311 = vadd.f32 %v1309, %v1310
        %v1312 = vsel %vm510, %v1287, 0.0
        %v1313 = vadd.f32 %v1311, %v1312
        %v1314 = vsel %vm510, %v1306, 0.0
        %v1315 = vadd.f32 %v1313, %v1314
        %v1316 = vadd.f32 %v507, %v1315
        %v1317 = vperm.slane %v509, 4
        %v1318 = vadd.f32 %v1316, %v1317
        %1319 = vst.msk [vmem:[#allocation2] sm:$0xff] %vm510, %v1318
        %v1321 = vsel %vm510, %v569, 0
        %1323 = vmatpush.bf16.msra.mxu0 0
        %1324 = vmatpush.bf16.msra.mxu0 0
        %1325 = vmatpush.bf16.msra.mxu0 0
        %1326 = vmatpush.bf16.msra.mxu0 0
        %1327 = vmatpush.bf16.msra.mxu0 0
        %1328 = vmatpush.bf16.msra.mxu0 0
        %1329 = vmatpush.bf16.msra.mxu0 %v661
        %1330 = vmatpush.bf16.msra.mxu0 %v660
        %1331 = vmatmul.bf16.gmra.mxu0 %v1321
        %v1332 = vpop.f32.mrf.mxu0
        %v1333 = vadd.f32 %v644, %v1332
        %v1334 = vpop.f32.mrf.mxu0
        %1335 = vdwg.mxu0
        %1336 = vmatpush.bf16.msra.mxu0 0
        %1337 = vmatpush.bf16.msra.mxu0 0
        %1338 = vmatpush.bf16.msra.mxu0 0
        %1339 = vmatpush.bf16.msra.mxu0 0
        %1340 = vmatpush.bf16.msra.mxu0 0
        %1341 = vmatpush.bf16.msra.mxu0 0
        %1342 = vmatpush.bf16.msra.mxu0 %v689
        %1343 = vmatpush.bf16.msra.mxu0 %v688
        %1344 = vmatmul.bf16.gmra.mxu0 %v1321
        %v1345 = vpop.f32.mrf.mxu0
        %v1346 = vadd.f32 %v645, %v1345
        %v1347 = vpop.f32.mrf.mxu0
        %1348 = vdwg.mxu0
        %1349 = vmatpush.bf16.msra.mxu0 0
        %1350 = vmatpush.bf16.msra.mxu0 0
        %1351 = vmatpush.bf16.msra.mxu0 0
        %1352 = vmatpush.bf16.msra.mxu0 0
        %1353 = vmatpush.bf16.msra.mxu0 0
        %1354 = vmatpush.bf16.msra.mxu0 0
        %1355 = vmatpush.bf16.msra.mxu0 %v714
        %1356 = vmatpush.bf16.msra.mxu0 %v713
        %1357 = vmatmul.bf16.gmra.mxu0 %v1321
        %v1358 = vpop.f32.mrf.mxu0
        %v1359 = vadd.f32 %v646, %v1358
        %v1360 = vpop.f32.mrf.mxu0
        %1361 = vdwg.mxu0
        %1362 = vmatpush.bf16.msra.mxu0 0
        %1363 = vmatpush.bf16.msra.mxu0 0
        %1364 = vmatpush.bf16.msra.mxu0 0
        %1365 = vmatpush.bf16.msra.mxu0 0
        %1366 = vmatpush.bf16.msra.mxu0 0
        %1367 = vmatpush.bf16.msra.mxu0 0
        %1368 = vmatpush.bf16.msra.mxu0 %v739
        %1369 = vmatpush.bf16.msra.mxu0 %v738
        %1370 = vmatmul.bf16.gmra.mxu0 %v1321
        %v1371 = vpop.f32.mrf.mxu0
        %v1372 = vadd.f32 %v647, %v1371
        %v1373 = vpop.f32.mrf.mxu0
        %1374 = vdwg.mxu0
        %1375 = vmatpush.bf16.msra.mxu0 0
        %1376 = vmatpush.bf16.msra.mxu0 0
        %1377 = vmatpush.bf16.msra.mxu0 0
        %1378 = vmatpush.bf16.msra.mxu0 0
        %1379 = vmatpush.bf16.msra.mxu0 0
        %1380 = vmatpush.bf16.msra.mxu0 0
        %1381 = vmatpush.bf16.msra.mxu0 %v776
        %1382 = vmatpush.bf16.msra.mxu0 %v775
        %1383 = vmatmul.bf16.gmra.mxu0 %v1321
        %v1384 = vpop.f32.mrf.mxu0
        %v1385 = vadd.f32 %v759, %v1384
        %v1386 = vpop.f32.mrf.mxu0
        %1387 = vdwg.mxu0
        %1388 = vmatpush.bf16.msra.mxu0 0
        %1389 = vmatpush.bf16.msra.mxu0 0
        %1390 = vmatpush.bf16.msra.mxu0 0
        %1391 = vmatpush.bf16.msra.mxu0 0
        %1392 = vmatpush.bf16.msra.mxu0 0
        %1393 = vmatpush.bf16.msra.mxu0 0
        %1394 = vmatpush.bf16.msra.mxu0 %v801
        %1395 = vmatpush.bf16.msra.mxu0 %v800
        %1396 = vmatmul.bf16.gmra.mxu0 %v1321
        %v1397 = vpop.f32.mrf.mxu0
        %v1398 = vadd.f32 %v760, %v1397
        %v1399 = vpop.f32.mrf.mxu0
        %1400 = vdwg.mxu0
        %1401 = vmatpush.bf16.msra.mxu0 0
        %1402 = vmatpush.bf16.msra.mxu0 0
        %1403 = vmatpush.bf16.msra.mxu0 0
        %1404 = vmatpush.bf16.msra.mxu0 0
        %1405 = vmatpush.bf16.msra.mxu0 0
        %1406 = vmatpush.bf16.msra.mxu0 0
        %1407 = vmatpush.bf16.msra.mxu0 %v826
        %1408 = vmatpush.bf16.msra.mxu0 %v825
        %1409 = vmatmul.bf16.gmra.mxu0 %v1321
        %v1410 = vpop.f32.mrf.mxu0
        %v1411 = vadd.f32 %v761, %v1410
        %v1412 = vpop.f32.mrf.mxu0
        %1413 = vdwg.mxu0
        %1414 = vmatpush.bf16.msra.mxu0 0
        %1415 = vmatpush.bf16.msra.mxu0 0
        %1416 = vmatpush.bf16.msra.mxu0 0
        %1417 = vmatpush.bf16.msra.mxu0 0
        %1418 = vmatpush.bf16.msra.mxu0 0
        %1419 = vmatpush.bf16.msra.mxu0 0
        %1420 = vmatpush.bf16.msra.mxu0 %v851
        %1421 = vmatpush.bf16.msra.mxu0 %v850
        %1422 = vmatmul.bf16.gmra.mxu0 %v1321
        %v1423 = vpop.f32.mrf.mxu0
        %v1424 = vadd.f32 %v762, %v1423
        %v1425 = vpop.f32.mrf.mxu0
        %1426 = vdwg.mxu0
        %1427 = vmatpush.bf16.msra.mxu0 0
        %1428 = vmatpush.bf16.msra.mxu0 0
        %1429 = vmatpush.bf16.msra.mxu0 0
        %1430 = vmatpush.bf16.msra.mxu0 0
        %1431 = vmatpush.bf16.msra.mxu0 0
        %1432 = vmatpush.bf16.msra.mxu0 0
        %1433 = vmatpush.bf16.msra.mxu0 %v888
        %1434 = vmatpush.bf16.msra.mxu0 %v887
        %1435 = vmatmul.bf16.gmra.mxu0 %v1321
        %v1436 = vpop.f32.mrf.mxu0
        %v1437 = vadd.f32 %v871, %v1436
        %v1438 = vpop.f32.mrf.mxu0
        %1439 = vdwg.mxu0
        %1440 = vmatpush.bf16.msra.mxu0 0
        %1441 = vmatpush.bf16.msra.mxu0 0
        %1442 = vmatpush.bf16.msra.mxu0 0
        %1443 = vmatpush.bf16.msra.mxu0 0
        %1444 = vmatpush.bf16.msra.mxu0 0
        %1445 = vmatpush.bf16.msra.mxu0 0
        %1446 = vmatpush.bf16.msra.mxu0 %v913
        %1447 = vmatpush.bf16.msra.mxu0 %v912
        %1448 = vmatmul.bf16.gmra.mxu0 %v1321
        %v1449 = vpop.f32.mrf.mxu0
        %v1450 = vadd.f32 %v872, %v1449
        %v1451 = vpop.f32.mrf.mxu0
        %1452 = vdwg.mxu0
        %1453 = vmatpush.bf16.msra.mxu0 0
        %1454 = vmatpush.bf16.msra.mxu0 0
        %1455 = vmatpush.bf16.msra.mxu0 0
        %1456 = vmatpush.bf16.msra.mxu0 0
        %1457 = vmatpush.bf16.msra.mxu0 0
        %1458 = vmatpush.bf16.msra.mxu0 0
        %1459 = vmatpush.bf16.msra.mxu0 %v938
        %1460 = vmatpush.bf16.msra.mxu0 %v937
        %1461 = vmatmul.bf16.gmra.mxu0 %v1321
        %v1462 = vpop.f32.mrf.mxu0
        %v1463 = vadd.f32 %v873, %v1462
        %v1464 = vpop.f32.mrf.mxu0
        %1465 = vdwg.mxu0
        %1466 = vmatpush.bf16.msra.mxu0 0
        %1467 = vmatpush.bf16.msra.mxu0 0
        %1468 = vmatpush.bf16.msra.mxu0 0
        %1469 = vmatpush.bf16.msra.mxu0 0
        %1470 = vmatpush.bf16.msra.mxu0 0
        %1471 = vmatpush.bf16.msra.mxu0 0
        %1472 = vmatpush.bf16.msra.mxu0 %v963
        %1473 = vmatpush.bf16.msra.mxu0 %v962
        %1474 = vmatmul.bf16.gmra.mxu0 %v1321
        %v1475 = vpop.f32.mrf.mxu0
        %v1476 = vadd.f32 %v874, %v1475
        %v1477 = vpop.f32.mrf.mxu0
        %1478 = vdwg.mxu0
        %v1480 = vsel %vm979, %v1333, 0
        %v1483 = vsel %vm979, %v1385, 0
        %1485 = vmatpush.xpose.msra.mxu0 0.0
        %1486 = vmatpush.xpose.msra.mxu0 0.0
        %1487 = vmatpush.xpose.msra.mxu0 0.0
        %1488 = vmatpush.xpose.msra.mxu0 0.0
        %1489 = vmatpush.xpose.msra.mxu0 0.0
        %1490 = vmatpush.xpose.msra.mxu0 0.0
        %1491 = vmatpush.xpose.msra.mxu0 0.0
        %1492 = vmatpush.xpose.msra.mxu0 0.0
        %1493 = vmatpush.xpose.msra.mxu0 0.0
        %1494 = vmatpush.xpose.msra.mxu0 0.0
        %1495 = vmatpush.xpose.msra.mxu0 0.0
        %1496 = vmatpush.xpose.msra.mxu0 0.0
        %1497 = vmatpush.xpose.msra.mxu0 0.0
        %1498 = vmatpush.xpose.msra.mxu0 0.0
        %1499 = vmatpush.xpose.msra.mxu0 0.0
        %1500 = vmatpush.xpose.msra.mxu0 %v1483
        %1501 = vmatmul.f32.gmra.mxu0 %v1480
        %v1502 = vpop.f32.mrf.mxu0
        %v1503 = vadd.f32 0.0, %v1502
        %1504 = vdwg.mxu0
        %v1506 = vsel %vm979, %v1346, 0
        %v1509 = vsel %vm979, %v1398, 0
        %1511 = vmatpush.xpose.msra.mxu0 0.0
        %1512 = vmatpush.xpose.msra.mxu0 0.0
        %1513 = vmatpush.xpose.msra.mxu0 0.0
        %1514 = vmatpush.xpose.msra.mxu0 0.0
        %1515 = vmatpush.xpose.msra.mxu0 0.0
        %1516 = vmatpush.xpose.msra.mxu0 0.0
        %1517 = vmatpush.xpose.msra.mxu0 0.0
        %1518 = vmatpush.xpose.msra.mxu0 0.0
        %1519 = vmatpush.xpose.msra.mxu0 0.0
        %1520 = vmatpush.xpose.msra.mxu0 0.0
        %1521 = vmatpush.xpose.msra.mxu0 0.0
        %1522 = vmatpush.xpose.msra.mxu0 0.0
        %1523 = vmatpush.xpose.msra.mxu0 0.0
        %1524 = vmatpush.xpose.msra.mxu0 0.0
        %1525 = vmatpush.xpose.msra.mxu0 0.0
        %1526 = vmatpush.xpose.msra.mxu0 %v1509
        %1527 = vmatmul.f32.gmra.mxu0 %v1506
        %v1528 = vpop.f32.mrf.mxu0
        %v1529 = vadd.f32 0.0, %v1528
        %1530 = vdwg.mxu0
        %v1532 = vsel %vm979, %v1359, 0
        %v1535 = vsel %vm979, %v1411, 0
        %1537 = vmatpush.xpose.msra.mxu0 0.0
        %1538 = vmatpush.xpose.msra.mxu0 0.0
        %1539 = vmatpush.xpose.msra.mxu0 0.0
        %1540 = vmatpush.xpose.msra.mxu0 0.0
        %1541 = vmatpush.xpose.msra.mxu0 0.0
        %1542 = vmatpush.xpose.msra.mxu0 0.0
        %1543 = vmatpush.xpose.msra.mxu0 0.0
        %1544 = vmatpush.xpose.msra.mxu0 0.0
        %1545 = vmatpush.xpose.msra.mxu0 0.0
        %1546 = vmatpush.xpose.msra.mxu0 0.0
        %1547 = vmatpush.xpose.msra.mxu0 0.0
        %1548 = vmatpush.xpose.msra.mxu0 0.0
        %1549 = vmatpush.xpose.msra.mxu0 0.0
        %1550 = vmatpush.xpose.msra.mxu0 0.0
        %1551 = vmatpush.xpose.msra.mxu0 0.0
        %1552 = vmatpush.xpose.msra.mxu0 %v1535
        %1553 = vmatmul.f32.gmra.mxu0 %v1532
        %v1554 = vpop.f32.mrf.mxu0
        %v1555 = vadd.f32 0.0, %v1554
        %1556 = vdwg.mxu0
        %v1558 = vsel %vm979, %v1372, 0
        %v1561 = vsel %vm979, %v1424, 0
        %1563 = vmatpush.xpose.msra.mxu0 0.0
        %1564 = vmatpush.xpose.msra.mxu0 0.0
        %1565 = vmatpush.xpose.msra.mxu0 0.0
        %1566 = vmatpush.xpose.msra.mxu0 0.0
        %1567 = vmatpush.xpose.msra.mxu0 0.0
        %1568 = vmatpush.xpose.msra.mxu0 0.0
        %1569 = vmatpush.xpose.msra.mxu0 0.0
        %1570 = vmatpush.xpose.msra.mxu0 0.0
        %1571 = vmatpush.xpose.msra.mxu0 0.0
        %1572 = vmatpush.xpose.msra.mxu0 0.0
        %1573 = vmatpush.xpose.msra.mxu0 0.0
        %1574 = vmatpush.xpose.msra.mxu0 0.0
        %1575 = vmatpush.xpose.msra.mxu0 0.0
        %1576 = vmatpush.xpose.msra.mxu0 0.0
        %1577 = vmatpush.xpose.msra.mxu0 0.0
        %1578 = vmatpush.xpose.msra.mxu0 %v1561
        %1579 = vmatmul.f32.gmra.mxu0 %v1558
        %v1580 = vpop.f32.mrf.mxu0
        %v1581 = vadd.f32 0.0, %v1580
        %1582 = vdwg.mxu0
        %v1583 = vmul.f32 %v1503, 0.35355338
        %v1584 = vmul.f32 %v1529, 0.35355338
        %v1585 = vmul.f32 %v1555, 0.35355338
        %v1586 = vmul.f32 %v1581, 0.35355338
        %v1587 = vadd.f32 %v1583, %v639
        %v1588 = vadd.f32 %v1584, %v639
        %v1589 = vadd.f32 %v1585, %v639
        %v1590 = vadd.f32 %v1586, %v639
        %v1591 = vsel %vm979, %v1587, -inf
        %1592 = vmax.xlane.f32.xlu0 %v1591
        %v1593 = vpop.xlane.xlu0 %1592
        %v1594 = vsel %vm979, %v1588, -inf
        %1595 = vmax.xlane.f32.xlu0 %v1594
        %v1596 = vpop.xlane.xlu0 %1595
        %v1597 = vsel %vm979, %v1589, -inf
        %1598 = vmax.xlane.f32.xlu0 %v1597
        %v1599 = vpop.xlane.xlu0 %1598
        %v1600 = vsel %vm979, %v1590, -inf
        %1601 = vmax.xlane.f32.xlu0 %v1600
        %v1602 = vpop.xlane.xlu0 %1601
        %v1603 = vsub.f32 %v1587, %v1593
        %v1604 = vsub.f32 %v1588, %v1596
        %v1605 = vsub.f32 %v1589, %v1599
        %v1606 = vsub.f32 %v1590, %v1602
        %v1607 = vmul.f32 %v1603, 1.442695
        %v1608 = vpow.pop %v1607
        %v1609 = vmul.f32 %v1604, 1.442695
        %v1610 = vpow.pop %v1609
        %v1611 = vmul.f32 %v1605, 1.442695
        %v1612 = vpow.pop %v1611
        %v1613 = vmul.f32 %v1606, 1.442695
        %v1614 = vpow.pop %v1613
        %v1615 = vsel %vm979, %v1608, 0.0
        %1616 = vadd.xlane.f32.xlu0 %v1615
        %v1617 = vpop.xlane.xlu0 %1616
        %v1618 = vsel %vm979, %v1610, 0.0
        %1619 = vadd.xlane.f32.xlu0 %v1618
        %v1620 = vpop.xlane.xlu0 %1619
        %v1621 = vsel %vm979, %v1612, 0.0
        %1622 = vadd.xlane.f32.xlu0 %v1621
        %v1623 = vpop.xlane.xlu0 %1622
        %v1624 = vsel %vm979, %v1614, 0.0
        %1625 = vadd.xlane.f32.xlu0 %v1624
        %v1626 = vpop.xlane.xlu0 %1625
        %v1627 = vrcp.pop %v1617
        %v1628 = vrcp.pop %v1620
        %v1629 = vrcp.pop %v1623
        %v1630 = vrcp.pop %v1626
        %v1631 = vmul.f32 %v1608, %v1627
        %v1632 = vmul.f32 %v1610, %v1628
        %v1633 = vmul.f32 %v1612, %v1629
        %v1634 = vmul.f32 %v1614, %v1630
        %v1636 = vsel %vm979, %v1631, 0
        %1638 = vmatpush.msra.mxu0 0.0
        %1639 = vmatpush.msra.mxu0 0.0
        %1640 = vmatpush.msra.mxu0 0.0
        %1641 = vmatpush.msra.mxu0 0.0
        %1642 = vmatpush.msra.mxu0 0.0
        %1643 = vmatpush.msra.mxu0 0.0
        %1644 = vmatpush.msra.mxu0 0.0
        %1645 = vmatpush.msra.mxu0 0.0
        %1646 = vmatpush.msra.mxu0 0.0
        %1647 = vmatpush.msra.mxu0 0.0
        %1648 = vmatpush.msra.mxu0 0.0
        %1649 = vmatpush.msra.mxu0 0.0
        %1650 = vmatpush.msra.mxu0 0.0
        %1651 = vmatpush.msra.mxu0 0.0
        %1652 = vmatpush.msra.mxu0 0.0
        %1653 = vmatpush.msra.mxu0 %v1437
        %1654 = vmatmul.f32.gmra.mxu0 %v1636
        %v1655 = vpop.f32.mrf.mxu0
        %v1656 = vadd.f32 0.0, %v1655
        %1657 = vdwg.mxu0
        %v1659 = vsel %vm979, %v1632, 0
        %1661 = vmatpush.msra.mxu0 0.0
        %1662 = vmatpush.msra.mxu0 0.0
        %1663 = vmatpush.msra.mxu0 0.0
        %1664 = vmatpush.msra.mxu0 0.0
        %1665 = vmatpush.msra.mxu0 0.0
        %1666 = vmatpush.msra.mxu0 0.0
        %1667 = vmatpush.msra.mxu0 0.0
        %1668 = vmatpush.msra.mxu0 0.0
        %1669 = vmatpush.msra.mxu0 0.0
        %1670 = vmatpush.msra.mxu0 0.0
        %1671 = vmatpush.msra.mxu0 0.0
        %1672 = vmatpush.msra.mxu0 0.0
        %1673 = vmatpush.msra.mxu0 0.0
        %1674 = vmatpush.msra.mxu0 0.0
        %1675 = vmatpush.msra.mxu0 0.0
        %1676 = vmatpush.msra.mxu0 %v1450
        %1677 = vmatmul.f32.gmra.mxu0 %v1659
        %v1678 = vpop.f32.mrf.mxu0
        %v1679 = vadd.f32 0.0, %v1678
        %1680 = vdwg.mxu0
        %v1682 = vsel %vm979, %v1633, 0
        %1684 = vmatpush.msra.mxu0 0.0
        %1685 = vmatpush.msra.mxu0 0.0
        %1686 = vmatpush.msra.mxu0 0.0
        %1687 = vmatpush.msra.mxu0 0.0
        %1688 = vmatpush.msra.mxu0 0.0
        %1689 = vmatpush.msra.mxu0 0.0
        %1690 = vmatpush.msra.mxu0 0.0
        %1691 = vmatpush.msra.mxu0 0.0
        %1692 = vmatpush.msra.mxu0 0.0
        %1693 = vmatpush.msra.mxu0 0.0
        %1694 = vmatpush.msra.mxu0 0.0
        %1695 = vmatpush.msra.mxu0 0.0
        %1696 = vmatpush.msra.mxu0 0.0
        %1697 = vmatpush.msra.mxu0 0.0
        %1698 = vmatpush.msra.mxu0 0.0
        %1699 = vmatpush.msra.mxu0 %v1463
        %1700 = vmatmul.f32.gmra.mxu0 %v1682
        %v1701 = vpop.f32.mrf.mxu0
        %v1702 = vadd.f32 0.0, %v1701
        %1703 = vdwg.mxu0
        %v1705 = vsel %vm979, %v1634, 0
        %1707 = vmatpush.msra.mxu0 0.0
        %1708 = vmatpush.msra.mxu0 0.0
        %1709 = vmatpush.msra.mxu0 0.0
        %1710 = vmatpush.msra.mxu0 0.0
        %1711 = vmatpush.msra.mxu0 0.0
        %1712 = vmatpush.msra.mxu0 0.0
        %1713 = vmatpush.msra.mxu0 0.0
        %1714 = vmatpush.msra.mxu0 0.0
        %1715 = vmatpush.msra.mxu0 0.0
        %1716 = vmatpush.msra.mxu0 0.0
        %1717 = vmatpush.msra.mxu0 0.0
        %1718 = vmatpush.msra.mxu0 0.0
        %1719 = vmatpush.msra.mxu0 0.0
        %1720 = vmatpush.msra.mxu0 0.0
        %1721 = vmatpush.msra.mxu0 0.0
        %1722 = vmatpush.msra.mxu0 %v1476
        %1723 = vmatmul.f32.gmra.mxu0 %v1705
        %v1724 = vpop.f32.mrf.mxu0
        %v1725 = vadd.f32 0.0, %v1724
        %1726 = vdwg.mxu0
        %v1727 = vpack.c.bf16 %v1656, %v1656
        %v1728 = vpack.c.bf16 %v1679, %v1679
        %v1729 = vpack.c.bf16 %v1702, %v1702
        %v1730 = vpack.c.bf16 %v1725, %v1725
        %v1732 = vsel %vm979, %v1727, 0
        %1734 = vmatpush.bf16.msra.mxu0 0
        %1735 = vmatpush.bf16.msra.mxu0 0
        %1736 = vmatpush.bf16.msra.mxu0 0
        %1737 = vmatpush.bf16.msra.mxu0 0
        %1738 = vmatpush.bf16.msra.mxu0 0
        %1739 = vmatpush.bf16.msra.mxu0 0
        %1740 = vmatpush.bf16.msra.mxu0 0
        %1741 = vmatpush.bf16.msra.mxu0 %v1237
        %1742 = vmatmul.bf16.gmra.mxu0 %v1732
        %v1743 = vpop.f32.mrf.mxu0
        %v1744 = vadd.f32 0.0, %v1743
        %v1745 = vpop.f32.mrf.mxu0
        %1746 = vdwg.mxu0
        %v1748 = vsel %vm979, %v1728, 0
        %1750 = vmatpush.bf16.msra.mxu0 0
        %1751 = vmatpush.bf16.msra.mxu0 0
        %1752 = vmatpush.bf16.msra.mxu0 0
        %1753 = vmatpush.bf16.msra.mxu0 0
        %1754 = vmatpush.bf16.msra.mxu0 0
        %1755 = vmatpush.bf16.msra.mxu0 0
        %1756 = vmatpush.bf16.msra.mxu0 0
        %1757 = vmatpush.bf16.msra.mxu0 %v1256
        %1758 = vmatmul.bf16.gmra.mxu0 %v1748
        %v1759 = vpop.f32.mrf.mxu0
        %v1760 = vadd.f32 0.0, %v1759
        %v1761 = vpop.f32.mrf.mxu0
        %1762 = vdwg.mxu0
        %v1764 = vsel %vm979, %v1729, 0
        %1766 = vmatpush.bf16.msra.mxu0 0
        %1767 = vmatpush.bf16.msra.mxu0 0
        %1768 = vmatpush.bf16.msra.mxu0 0
        %1769 = vmatpush.bf16.msra.mxu0 0
        %1770 = vmatpush.bf16.msra.mxu0 0
        %1771 = vmatpush.bf16.msra.mxu0 0
        %1772 = vmatpush.bf16.msra.mxu0 0
        %1773 = vmatpush.bf16.msra.mxu0 %v1275
        %1774 = vmatmul.bf16.gmra.mxu0 %v1764
        %v1775 = vpop.f32.mrf.mxu0
        %v1776 = vadd.f32 0.0, %v1775
        %v1777 = vpop.f32.mrf.mxu0
        %1778 = vdwg.mxu0
        %v1780 = vsel %vm979, %v1730, 0
        %1782 = vmatpush.bf16.msra.mxu0 0
        %1783 = vmatpush.bf16.msra.mxu0 0
        %1784 = vmatpush.bf16.msra.mxu0 0
        %1785 = vmatpush.bf16.msra.mxu0 0
        %1786 = vmatpush.bf16.msra.mxu0 0
        %1787 = vmatpush.bf16.msra.mxu0 0
        %1788 = vmatpush.bf16.msra.mxu0 0
        %1789 = vmatpush.bf16.msra.mxu0 %v1294
        %1790 = vmatmul.bf16.gmra.mxu0 %v1780
        %v1791 = vpop.f32.mrf.mxu0
        %v1792 = vadd.f32 0.0, %v1791
        %v1793 = vpop.f32.mrf.mxu0
        %1794 = vdwg.mxu0
        %v1795 = vsel %vm510, %v1744, 0.0
        %v1796 = vsel %vm510, %v1760, 0.0
        %v1797 = vadd.f32 %v1795, %v1796
        %v1798 = vsel %vm510, %v1776, 0.0
        %v1799 = vadd.f32 %v1797, %v1798
        %v1800 = vsel %vm510, %v1792, 0.0
        %v1801 = vadd.f32 %v1799, %v1800
        %v1802 = vadd.f32 %v508, %v1801
        %v1803 = vadd.f32 %v1802, %v1317
        %s1804 = scalar_lea.vmem [#allocation2], 8
        %1805 = vst.msk [vmem:[%s1804] sm:$0xff] %vm510, %v1803
        %v1806 = vld [vmem:[#allocation2] sm:$0xff]
        %v1807 = vld [vmem:[#allocation2 + $0x8] sm:$0xff]
        %v1808 = vsel %vm510, %v1806, 0.0
        %1809 = vadd.xlane.f32.xlu0 %v1808
        %v1810 = vpop.xlane.xlu0 %1809
        %v1811 = vsel %vm510, %v1807, 0.0
        %1812 = vadd.xlane.f32.xlu0 %v1811
        %v1813 = vpop.xlane.xlu0 %1812
        %v1814 = vmul.f32 %v1810, %v523
        %v1815 = vmul.f32 %v1813, %v523
        %v1816 = vsub.f32 %v1806, %v1814
        %v1817 = vsub.f32 %v1807, %v1815
        %v1818 = vmul.f32 %v1816, %v1816
        %v1819 = vmul.f32 %v1817, %v1817
        %v1820 = vsel %vm510, %v1818, 0.0
        %1821 = vadd.xlane.f32.xlu0 %v1820
        %v1822 = vpop.xlane.xlu0 %1821
        %v1823 = vsel %vm510, %v1819, 0.0
        %1824 = vadd.xlane.f32.xlu0 %v1823
        %v1825 = vpop.xlane.xlu0 %1824
        %v1826 = vmul.f32 %v1822, %v523
        %v1827 = vmul.f32 %v1825, %v523
        %v1828 = vadd.f32 %v1826, 1e-05
        %v1829 = vadd.f32 %v1827, 1e-05
        %v1830 = vrsqrt.pop %v1828
        %v1831 = vmul.f32 %v1830, %v1828
        %v1832 = vmul.f32 %v1831, %v1830
        %v1833 = vmul.f32 0.5, %v1832
        %v1834 = vsub.f32 1.5, %v1833
        %v1835 = vmul.f32 %v1830, %v1834
        %vm1836 = vweird.f32 %v1828
        %vm1837 = vweird.f32 %v1830
        %vm1838 = vmor %vm1836, %vm1837
        %v1839 = vsel %vm1838, %v1830, %v1835
        %v1840 = vrsqrt.pop %v1829
        %v1841 = vmul.f32 %v1840, %v1829
        %v1842 = vmul.f32 %v1841, %v1840
        %v1843 = vmul.f32 0.5, %v1842
        %v1844 = vsub.f32 1.5, %v1843
        %v1845 = vmul.f32 %v1840, %v1844
        %vm1846 = vweird.f32 %v1829
        %vm1847 = vweird.f32 %v1840
        %vm1848 = vmor %vm1846, %vm1847
        %v1849 = vsel %vm1848, %v1840, %v1845
        %v1850 = vmul.f32 %v1816, %v1839
        %v1851 = vmul.f32 %v1817, %v1849
        %v1852 = vperm.slane %v509, 2
        %v1853 = vmul.f32 %v1850, %v1852
        %v1854 = vmul.f32 %v1851, %v1852
        %v1855 = vperm.slane %v509, 3
        %v1856 = vadd.f32 %v1853, %v1855
        %v1857 = vadd.f32 %v1854, %v1855
        %v1858 = vpack.c.bf16 %v1857, %v1856
        %v1859 = vld [vmem:[%s484] sm:$0xf]
        %v1860 = vld [vmem:[%s484 + $0x4] sm:$0xf]
        %v1861 = vld [vmem:[%s484 + $0x8] sm:$0xf]
        %v1862 = vld [vmem:[%s484 + $0xc] sm:$0xf]
        %v1863 = vld [vmem:[%s487] sm:$0x1]
        %v1865 = vperm.slane %v1863, 0
        %v1871 = vunpack.c.l.b16 %v1859
        %v1872 = vunpack.c.l.b16 %v1860
        %v1873 = vunpack.c.l.b16 %v1861
        %v1874 = vunpack.c.l.b16 %v1862
        %v1875 = vpack.c.b16 %v1872, %v1871
        %v1876 = vpack.c.b16 %v1874, %v1873
        %v1880 = vsel %vm510, %v1858, 0
        %1882 = vmatpush.bf16.msra.mxu0 0
        %1883 = vmatpush.bf16.msra.mxu0 0
        %1884 = vmatpush.bf16.msra.mxu0 0
        %1885 = vmatpush.bf16.msra.mxu0 0
        %1886 = vmatpush.bf16.msra.mxu0 0
        %1887 = vmatpush.bf16.msra.mxu0 0
        %1888 = vmatpush.bf16.msra.mxu0 %v1876
        %1889 = vmatpush.bf16.msra.mxu0 %v1875
        %1890 = vmatmul.bf16.gmra.mxu0 %v1880
        %v1891 = vpop.f32.mrf.mxu0
        %v1892 = vadd.f32 %v1865, %v1891
        %v1893 = vpop.f32.mrf.mxu0
        %v1894 = vadd.f32 %v1865, %v1893
        %1895 = vdwg.mxu0
        %v1896 = vmul.f32 %v1892, %v1892
        %v1897 = vmul.f32 %v1894, %v1894
        %v1898 = vmul.f32 %v1892, %v1896
        %v1899 = vmul.f32 %v1894, %v1897
        %v1900 = vmul.f32 %v1898, 0.044715
        %v1901 = vmul.f32 %v1899, 0.044715
        %v1902 = vadd.f32 %v1892, %v1900
        %v1903 = vadd.f32 %v1894, %v1901
        %v1904 = vmul.f32 %v1902, 0.7978846
        %v1905 = vmul.f32 %v1903, 0.7978846
        %v1906 = vtanh.pop %v1904
        %v1907 = vtanh.pop %v1905
        %v1908 = vadd.f32 %v1906, 1.0
        %v1909 = vadd.f32 %v1907, 1.0
        %v1910 = vmul.f32 %v1908, 0.5
        %v1911 = vmul.f32 %v1909, 0.5
        %v1912 = vmul.f32 %v1892, %v1910
        %v1913 = vmul.f32 %v1894, %v1911
        %v1914 = vpack.c.bf16 %v1913, %v1912
        %v1915 = vld [vmem:[%s492] sm:$0xf]
        %v1916 = vld [vmem:[%s492 + $0x4] sm:$0xf]
        %v1917 = vld [vmem:[%s492 + $0x8] sm:$0xf]
        %v1918 = vld [vmem:[%s492 + $0xc] sm:$0xf]
        %v1919 = vld [vmem:[%s492 + $0x10] sm:$0xf]
        %v1920 = vld [vmem:[%s492 + $0x14] sm:$0xf]
        %v1921 = vld [vmem:[%s492 + $0x18] sm:$0xf]
        %v1922 = vld [vmem:[%s492 + $0x1c] sm:$0xf]
        %v1923 = vld [vmem:[%s492 + $0x20] sm:$0xf]
        %v1924 = vld [vmem:[%s492 + $0x24] sm:$0xf]
        %v1925 = vld [vmem:[%s492 + $0x28] sm:$0xf]
        %v1926 = vld [vmem:[%s492 + $0x2c] sm:$0xf]
        %v1927 = vld [vmem:[%s492 + $0x30] sm:$0xf]
        %v1928 = vld [vmem:[%s492 + $0x34] sm:$0xf]
        %v1929 = vld [vmem:[%s492 + $0x38] sm:$0xf]
        %v1930 = vld [vmem:[%s492 + $0x3c] sm:$0xf]
        %v1947 = vunpack.c.l.b16 %v1915
        %v1948 = vunpack.c.l.b16 %v1916
        %v1949 = vunpack.c.l.b16 %v1917
        %v1950 = vunpack.c.l.b16 %v1918
        %v1951 = vunpack.c.l.b16 %v1919
        %v1952 = vunpack.c.l.b16 %v1920
        %v1953 = vunpack.c.l.b16 %v1921
        %v1954 = vunpack.c.l.b16 %v1922
        %v1955 = vunpack.c.l.b16 %v1923
        %v1956 = vunpack.c.l.b16 %v1924
        %v1957 = vunpack.c.l.b16 %v1925
        %v1958 = vunpack.c.l.b16 %v1926
        %v1959 = vunpack.c.l.b16 %v1927
        %v1960 = vunpack.c.l.b16 %v1928
        %v1961 = vunpack.c.l.b16 %v1929
        %v1962 = vunpack.c.l.b16 %v1930
        %v1963 = vpack.c.b16 %v1948, %v1947
        %v1964 = vpack.c.b16 %v1950, %v1949
        %v1965 = vpack.c.b16 %v1952, %v1951
        %v1966 = vpack.c.b16 %v1954, %v1953
        %v1967 = vpack.c.b16 %v1956, %v1955
        %v1968 = vpack.c.b16 %v1958, %v1957
        %v1969 = vpack.c.b16 %v1960, %v1959
        %v1970 = vpack.c.b16 %v1962, %v1961
        %1979 = vmatpush.bf16.msra.mxu0 %v1970
        %1980 = vmatpush.bf16.msra.mxu0 %v1969
        %1981 = vmatpush.bf16.msra.mxu0 %v1968
        %1982 = vmatpush.bf16.msra.mxu0 %v1967
        %1983 = vmatpush.bf16.msra.mxu0 %v1966
        %1984 = vmatpush.bf16.msra.mxu0 %v1965
        %1985 = vmatpush.bf16.msra.mxu0 %v1964
        %1986 = vmatpush.bf16.msra.mxu0 %v1963
        %1987 = vmatmul.bf16.gmra.mxu0 %v1914
        %v1988 = vpop.f32.mrf.mxu0
        %v1989 = vadd.f32 0.0, %v1988
        %v1990 = vpop.f32.mrf.mxu0
        %v1991 = vadd.f32 0.0, %v1990
        %1992 = vdwg.mxu0
        %v1993 = vadd.f32 %v1806, %v1989
        %v1994 = vadd.f32 %v1807, %v1991
        %v1995 = vperm.slane %v509, 5
        %v1996 = vadd.f32 %v1993, %v1995
        %v1997 = vadd.f32 %v1994, %v1995
        %1998 = vst.msk [vmem:[#allocation2] sm:$0xff] %vm510, %v1996
        %1999 = vst.msk [vmem:[#allocation2 + $0x8] sm:$0xff] %vm510, %v1997
        %p2000 = scmp.eq.s32.totalorder %s27, 1
        // Predicated region
        $region65: #{clip_text_forward.1} parent=59 // pred_check
          %p2001 = pneg %p2000
        $region66: #{clip_text_forward.1} parent=59 // pred_check_branch
          %2003 = sbr.rel (%p2001) target = $region68
        $region67: #{clip_text_forward.1} parent=59 // pred_region
          %v2004 = vld [vmem:[%s2] sm:$0x3]
          %v2005 = vsel %vm510, %v1996, 0.0
          %2006 = vadd.xlane.f32.xlu0 %v2005
          %v2007 = vpop.xlane.xlu0 %2006
          %v2008 = vsel %vm510, %v1997, 0.0
          %2009 = vadd.xlane.f32.xlu0 %v2008
          %v2010 = vpop.xlane.xlu0 %2009
          %v2011 = vmul.f32 %v2007, %v523
          %v2012 = vmul.f32 %v2010, %v523
          %v2013 = vsub.f32 %v1996, %v2011
          %v2014 = vsub.f32 %v1997, %v2012
          %v2015 = vmul.f32 %v2013, %v2013
          %v2016 = vmul.f32 %v2014, %v2014
          %v2017 = vsel %vm510, %v2015, 0.0
          %2018 = vadd.xlane.f32.xlu0 %v2017
          %v2019 = vpop.xlane.xlu0 %2018
          %v2020 = vsel %vm510, %v2016, 0.0
          %2021 = vadd.xlane.f32.xlu0 %v2020
          %v2022 = vpop.xlane.xlu0 %2021
          %v2023 = vmul.f32 %v2019, %v523
          %v2024 = vmul.f32 %v2022, %v523
          %v2025 = vadd.f32 %v2023, 1e-05
          %v2026 = vadd.f32 %v2024, 1e-05
          %v2027 = vrsqrt.pop %v2025
          %v2028 = vmul.f32 %v2027, %v2025
          %v2029 = vmul.f32 %v2028, %v2027
          %v2030 = vmul.f32 0.5, %v2029
          %v2031 = vsub.f32 1.5, %v2030
          %v2032 = vmul.f32 %v2027, %v2031
          %vm2033 = vweird.f32 %v2025
          %vm2034 = vweird.f32 %v2027
          %vm2035 = vmor %vm2033, %vm2034
          %v2036 = vsel %vm2035, %v2027, %v2032
          %v2037 = vrsqrt.pop %v2026
          %v2038 = vmul.f32 %v2037, %v2026
          %v2039 = vmul.f32 %v2038, %v2037
          %v2040 = vmul.f32 0.5, %v2039
          %v2041 = vsub.f32 1.5, %v2040
          %v2042 = vmul.f32 %v2037, %v2041
          %vm2043 = vweird.f32 %v2026
          %vm2044 = vweird.f32 %v2037
          %vm2045 = vmor %vm2043, %vm2044
          %v2046 = vsel %vm2045, %v2037, %v2042
          %v2047 = vmul.f32 %v2013, %v2036
          %v2048 = vmul.f32 %v2014, %v2046
          %v2049 = vperm.slane %v2004, 0
          %v2050 = vmul.f32 %v2047, %v2049
          %v2051 = vmul.f32 %v2048, %v2049
          %v2052 = vperm.slane %v2004, 1
          %v2053 = vadd.f32 %v2050, %v2052
          %v2054 = vadd.f32 %v2051, %v2052
          %2055 = vst.msk [vmem:[#allocation3] sm:$0xff] %vm510, %v2053
          %2056 = vst.msk [vmem:[#allocation3 + $0x8] sm:$0xff] %vm510, %v2054
        $region68: #{clip_text_forward.1} parent=59 // pred_fallthru
          _
        // Predicated region
        $region69: #{clip_text_forward.1} parent=59 // pred_check
          %p2057 = pneg %p302
        $region70: #{clip_text_forward.1} parent=59 // pred_check_branch
          %2059 = sbr.rel (%p2057) target = $region72
        $region71: #{clip_text_forward.1} parent=59 // pred_region
          %s2060 = smul.u32 2, %s26
          %2062 = vsyncadd [#allocation4], 0
          %s2063 = smul.addr %s2060, 8
          %s2064 = scalar_lea.hbm %s10, %s2063
          %s2065 = sshll.u32 [#allocation3], 4
          %s2066 = int_to_ptr.vmem [resolvable:$true] %s2065
          %s2067 = sshll.u32 %s2064, 4
          %s2068 = int_to_ptr.hbm [resolvable:$true] %s2067
          %2073 = dma.vmem_to_hbm [thread:$0]  %s2066, 256, %s2068, [#allocation4], 128, 128, 8
        $region72: #{clip_text_forward.1} parent=59 // pred_fallthru
          _
        // Predicated region
        $region73: #{clip_text_forward.1} parent=59 // pred_check
          %p2074 = pneg %p302
        $region74: #{clip_text_forward.1} parent=59 // pred_check_branch
          %2076 = sbr.rel (%p2074) target = $region76
        $region75: #{clip_text_forward.1} parent=59 // pred_region
          %2078 = dma.done [#allocation4], 256
        $region76: #{clip_text_forward.1} parent=59 // pred_fallthru
          _
      $region60: #{clip_text_forward.1} parent=5 // pred_fallthru
        _
      %p2079 = scmp.le.s32.totalorder 2, %s17
      // Predicated region
      $region77: #{clip_text_forward.1} parent=5 // pred_check
        %p2080 = pneg %p2079
      $region78: #{clip_text_forward.1} parent=5 // pred_check_branch
        %2082 = sbr.rel (%p2080) target = $region80
      $region79: #{clip_text_forward.1} parent=5 // pred_region
        %s2083 = ssub.s32 %s17, 2
      $region80: #{clip_text_forward.1} parent=5 // pred_fallthru
        _
    $region6: #{clip_text_forward.1} parent=1 // loop_footer
      %s21 = sadd.s32 1, %s17
    $region7: #{clip_text_forward.1} parent=1 // loop_footer_branch
      %16 = sbr.rel target = $region3
    $region8: #{clip_text_forward.1} parent=1 // loop_exit
      _
    %2084 = vsyncpa [#allocation4], 1
    %s2085 = scalar_lea.sflag [#allocation4], 1
    %2086 = vsyncpa %s2085, 1

</llo_original>
